<compile_context>
chip_gen: v7x
topology: tpu7x:2x2x1
jax: 0.10.0
libtpu: 0.0.40
codegen_flags: <defaults>
</compile_context>

<pallas_src>
from itertools import groupby

import numpy as np
import jax
import jax.numpy as jnp
from jax import lax
from jax.experimental import pallas as pl
from jax.experimental.pallas import tpu as pltpu

HIDDEN = 768          # fixed by the module's parameter shapes
N_ANCHOR = 66
N_REL = 57
N_NOTA = 20

SCORE_LANES = 128     # lane-dense score output width (>= 1 + N_REL, NOTA block fits)
REL_COL0 = 1          # relation scores live in columns [1, 1 + N_REL)
NOTA_COL0 = 64        # NOTA scores live in columns [64, 64 + N_NOTA)
VMEM_LIMIT = 32 * 1024 * 1024


def _round_up(x, m):
    return ((x + m - 1) // m) * m


def _span_mask(starts, ends, L):
    """(E_pad, L) matrix: row e = 1/len(span_e) on [start_e, end_e), else 0.

    Degenerate / padded spans (start == end) give an all-zero row (the torch
    module would produce NaN for an empty span; intentional difference).
    """
    E_pad = starts.shape[0]
    idx = lax.broadcasted_iota(jnp.int32, (E_pad, L), 1)
    cnt = jnp.maximum(ends - starts, 1).astype(jnp.float32)
    return jnp.where((idx >= starts) & (idx < ends), 1.0 / cnt, 0.0)


# ----------------------------------------------------------------------------
# Kernel 1 (gridless): span-mask build + entity mean-pool of sequence_output,
# immediately folded into the fused (W_s | W_o) score weights, plus seq @ W_c.
#   M       : (E_pad, L)        span-mask, re-used by kernel 2 (emitted bf16)
#   base_so : (M @ seq) @ [W_s | W_o]   (E_pad, 256)  single 256-wide MXU matmul
#   seqw    : seq @ W_c                 (L, 128)
# ----------------------------------------------------------------------------
def _entity_embed_kernel(starts_ref, ends_ref, seq_ref, w_so_ref, w_c_ref,
                         base_ref, seqw_ref, m_ref):
    L = seq_ref.shape[0]
    mw = _span_mask(starts_ref[...], ends_ref[...], L)                   # (E_pad, L)
    emb = jnp.dot(mw, seq_ref[...], preferred_element_type=jnp.float32)  # (E_pad, H)
    base_ref[...] = jnp.dot(emb, w_so_ref[...],
                            preferred_element_type=jnp.float32)          # (E_pad, 256)
    seqw_ref[...] = jnp.dot(seq_ref[...], w_c_ref[...],
                            preferred_element_type=jnp.float32)          # (L, 128)
    m_ref[...] = mw.astype(jnp.bfloat16)


# ----------------------------------------------------------------------------
# Kernel 2 (grid over head-chunks, "parallel"): span mean-pool of attention,
# written directly in the flat (E_pad, NH*L) layout used by kernel 3.
#   out[:, h*L:(h+1)*L] = M @ attn[h]        (bf16 MXU operands, f32 accumulate)
# ----------------------------------------------------------------------------
def _att_pool_kernel(m_ref, attn_ref, out_ref):
    Hc = attn_ref.shape[0]
    L = attn_ref.shape[1]
    mw = m_ref[...]                                                      # (E_pad, L) bf16
    for h in range(Hc):                                                  # static unroll
        pooled = jnp.dot(mw, attn_ref[h].astype(jnp.bfloat16),
                         preferred_element_type=jnp.float32)             # (E_pad, L)
        out_ref[:, h * L:(h + 1) * L] = pooled.astype(jnp.bfloat16)


# ----------------------------------------------------------------------------
# Kernel 3 (grid over pair tiles, "parallel"): fused localized-context pooling +
# relation scoring for a tile of TP (trigger, object) pairs via one-hot MXU
# gathers (no serial per-pair loop).
#   G_s/G_o  = one-hot(TP, E_pad) from the pair index vectors
#   b        = G_s @ base[:, :128] + G_o @ base[:, 128:]        (exact gathers)
#   A_s, A_o = G_s @ ent_att_flat , G_o @ ent_att_flat          (TP, NH*L)
#   q[p]     = sum_h A_s[p,h,:] * A_o[p,h,:] ;  a = q / (sum q + 1e-30)
#   out[p]   = [max NOTA | rel scores | pad]  (128-lane unmasked vst)
# Padded rows in the last tile are (0,0) self-pairs; they are computed and then
# sliced off by the wrapper — never interpreted.
# ----------------------------------------------------------------------------
def _pair_score_kernel(s_idx_ref, o_idx_ref, att_ref, base_ref, seqw_ref, out_ref):
    TP = out_ref.shape[0]
    E_pad = base_ref.shape[0]
    L = seqw_ref.shape[0]
    NH = att_ref.shape[1] // L

    ent_iota = lax.broadcasted_iota(jnp.int32, (TP, E_pad), 1)
    m_s = ent_iota == s_idx_ref[...]                                     # (TP, E_pad)
    m_o = ent_iota == o_idx_ref[...]
    g_s32 = m_s.astype(jnp.float32)
    g_o32 = m_o.astype(jnp.float32)
    g_s16 = m_s.astype(jnp.bfloat16)
    g_o16 = m_o.astype(jnp.bfloat16)

    # per-pair partial scores emb_s@W_s + emb_o@W_o (one-hot gather == exact)
    b = (jnp.dot(g_s32, base_ref[:, :SCORE_LANES],
                 preferred_element_type=jnp.float32)
         + jnp.dot(g_o32, base_ref[:, SCORE_LANES:],
                   preferred_element_type=jnp.float32))                  # (TP, 128)

    # gathered per-head pooled attention rows (bf16 values -> f32 accum)
    att = att_ref[...]                                                   # (E_pad, NH*L)
    a_s = jnp.dot(g_s16, att, preferred_element_type=jnp.float32)        # (TP, NH*L)
    a_o = jnp.dot(g_o16, att, preferred_element_type=jnp.float32)
    prod = a_s * a_o

    # q[p, l] = sum_h prod[p, h*L + l]   (static lane-aligned slices)
    q = prod[:, 0:L]
    for h in range(1, NH):
        q = q + prod[:, h * L:(h + 1) * L]
    denom = jnp.sum(q, axis=-1, keepdims=True) + 1e-30
    a = q / denom                                                        # exact division

    full = b + jnp.dot(a, seqw_ref[...],
                       preferred_element_type=jnp.float32)               # (TP, 128)
    nmax = jnp.max(full[:, NOTA_COL0:NOTA_COL0 + N_NOTA], axis=-1, keepdims=True)
    lane = lax.broadcasted_iota(jnp.int32, full.shape, 1)
    out_ref[...] = jnp.where(lane == 0, nmax, full)


# ----------------------------------------------------------------------------
# Wrappers
# ----------------------------------------------------------------------------
def build_score_weights(rel_emb, nota_emb):
    """Pack [zero | rel.T | zero | nota.T | zero] into lane-dense blocks.

    Returns:
      w_so : (H, 256)  — W_s half in lanes [0,128), W_o half in lanes [128,256)
      w_c  : (H, 128)  — W_c (context) half
    """
    h3 = rel_emb.shape[1]
    H = h3 // 3
    w = jnp.zeros((h3, SCORE_LANES), jnp.float32)
    w = w.at[:, REL_COL0:REL_COL0 + N_REL].set(rel_emb.T.astype(jnp.float32))
    w = w.at[:, NOTA_COL0:NOTA_COL0 + N_NOTA].set(nota_emb.T.astype(jnp.float32))
    w_so = jnp.concatenate([w[:H], w[H:2 * H]], axis=1)   # (H, 256)
    w_c = w[2 * H:]                                       # (H, 128)
    return w_so, w_c


def pool_entities(seq, attn, starts, ends, w_so, w_c):
    L, _ = seq.shape
    NH = attn.shape[0]
    E = starts.shape[0]
    E_pad = _round_up(E, 16)   # 16: aligned for bf16 sublane packing of M / ent_att
    st = jnp.zeros((E_pad, 1), jnp.int32).at[:E, 0].set(starts)
    en = jnp.zeros((E_pad, 1), jnp.int32).at[:E, 0].set(ends)

    base_so, seqw, m_bf16 = pl.pallas_call(
        _entity_embed_kernel,
        out_shape=(jax.ShapeDtypeStruct((E_pad, 2 * SCORE_LANES), jnp.float32),
                   jax.ShapeDtypeStruct((L, SCORE_LANES), jnp.float32),
                   jax.ShapeDtypeStruct((E_pad, L), jnp.bfloat16)),
        compiler_params=pltpu.CompilerParams(vmem_limit_bytes=VMEM_LIMIT),
    )(st, en, seq, w_so, w_c)

    # Hc heads per grid step (amortizes per-step overhead; attention stream is
    # HBM-bound).  At L >= 1024 cap Hc lower on v7x's 64 MiB VMEM.
    Hc = next(h for h in (4, 3, 2, 1) if NH % h == 0)
    ent_att = pl.pallas_call(
        _att_pool_kernel,
        out_shape=jax.ShapeDtypeStruct((E_pad, NH * L), jnp.bfloat16),
        grid=(NH // Hc,),
        in_specs=[pl.BlockSpec((E_pad, L), lambda h: (0, 0)),
                  pl.BlockSpec((Hc, L, L), lambda h: (h, 0, 0))],
        out_specs=pl.BlockSpec((E_pad, Hc * L), lambda h: (0, h)),
        compiler_params=pltpu.CompilerParams(
            dimension_semantics=("parallel",),
            vmem_limit_bytes=VMEM_LIMIT),
    )(m_bf16, attn)

    return base_so, seqw, ent_att


def pair_scores(ent_att, base_so, seqw, s_idx, o_idx, max_tile=256):
    E_pad = base_so.shape[0]
    NHL = ent_att.shape[1]
    L = seqw.shape[0]
    P = s_idx.shape[0]

    # balanced tiles, and >=2 chunks so both v7x TensorCores get work
    n_chunks = max(2, pl.cdiv(P, max_tile))
    tile_pairs = _round_up(pl.cdiv(P, n_chunks), 8)
    n_tiles = pl.cdiv(P, tile_pairs)
    P_pad = n_tiles * tile_pairs

    # padded pairs are (0, 0) self-pairs; their rows are sliced off below
    s_pad = jnp.zeros((P_pad, 1), jnp.int32).at[:P, 0].set(s_idx)
    o_pad = jnp.zeros((P_pad, 1), jnp.int32).at[:P, 0].set(o_idx)

    full = pl.pallas_call(
        _pair_score_kernel,
        out_shape=jax.ShapeDtypeStruct((P_pad, SCORE_LANES), jnp.float32),
        grid=(n_tiles,),
        in_specs=[
            pl.BlockSpec((tile_pairs, 1), lambda t: (t, 0)),
            pl.BlockSpec((tile_pairs, 1), lambda t: (t, 0)),
            # constant index maps: Pallas keeps these resident, no re-DMA per tile
            pl.BlockSpec((E_pad, NHL), lambda t: (0, 0)),
            pl.BlockSpec((E_pad, 2 * SCORE_LANES), lambda t: (0, 0)),
            pl.BlockSpec((L, SCORE_LANES), lambda t: (0, 0)),
        ],
        out_specs=pl.BlockSpec((tile_pairs, SCORE_LANES), lambda t: (t, 0)),
        compiler_params=pltpu.CompilerParams(
            dimension_semantics=("parallel",),
            vmem_limit_bytes=VMEM_LIMIT),
    )(s_pad, o_pad, ent_att, base_so, seqw)
    return full[:P, :1 + N_REL]


# ----------------------------------------------------------------------------
# Pure-JAX reference (module semantics, f32) for correctness checking
# ----------------------------------------------------------------------------
def _reference(seq, attn, spans, pairs, rel_emb, nota_emb):
    ent_emb = jnp.stack([jnp.mean(seq[st:en, :], axis=0) for (st, en) in spans])
    ent_att = jnp.stack([jnp.mean(attn[:, st:en, :], axis=1) for (st, en) in spans])
    ctxs = []
    for (s, o) in pairs:
        A = ent_att[o] * ent_att[s]
        q = jnp.sum(A, axis=0)
        a = q / (jnp.sum(q) + 1e-30)
        ctxs.append(seq.T @ a)
    ctx = jnp.stack(ctxs)
    s_idx = jnp.asarray([p[0] for p in pairs])
    o_idx = jnp.asarray([p[1] for p in pairs])
    concat = jnp.concatenate([ent_emb[s_idx], ent_emb[o_idx], ctx], axis=-1)
    scores = concat @ rel_emb.T
    nota = jnp.max(concat @ nota_emb.T, axis=-1, keepdims=True)
    return jnp.concatenate([nota, scores], axis=-1)


# ----------------------------------------------------------------------------
# Forward (eval mode, e2e=False, at_inference=False)
# ----------------------------------------------------------------------------
def encoder_forward(sequence_output, attention, entity_spans, entity_types,
                    entity_ids, batch_text, params, relation_types, feasible_roles):
    B = sequence_output.shape[0]
    mention_loss = jnp.zeros((1,), sequence_output.dtype)
    argex_loss = jnp.zeros((1,), sequence_output.dtype)
    counter = 0

    # hoisted once per forward: fused, lane-padded score weights
    w_so, w_c = build_score_weights(params['relation_embeddings'],
                                    params['nota_embeddings'])

    # all device work is issued here; the host sync happens once, below
    pending = []   # (b, spans, pairs, scores_dev, preds_dev)
    for b in range(B):
        spans = entity_spans[b]
        if len(spans) == 0:
            continue
        starts = jnp.asarray([sp[0][0] for sp in spans], dtype=jnp.int32)
        ends = jnp.asarray([sp[0][1] for sp in spans], dtype=jnp.int32)

        base_so, seqw, ent_att = pool_entities(
            sequence_output[b], attention[b], starts, ends, w_so, w_c)

        pairs = []
        for s in range(len(spans)):
            if entity_types[b][s].split('.')[-1] != 'TRIGGER':
                continue
            for o in range(len(spans)):
                if s != o:
                    pairs.append((s, o))
        if len(pairs) == 0:
            continue
        s_idx = jnp.asarray([p[0] for p in pairs], dtype=jnp.int32)
        o_idx = jnp.asarray([p[1] for p in pairs], dtype=jnp.int32)

        scores = pair_scores(ent_att, base_so, seqw, s_idx, o_idx)
        predictions = jnp.argmax(scores, axis=-1)
        pending.append((b, spans, pairs, scores, predictions))

    # single host sync for the whole forward (no per-batch-item device_get)
    preds_host = jax.device_get([p[4] for p in pending]) if pending else []

    batch_triples, batch_events, debug = [], [], []
    for (b, spans, pairs, scores, _), preds in zip(pending, preds_host):
        preds = np.asarray(preds)
        debug.append((b, spans, pairs, scores))

        triples = [{pair: relation_types[int(preds[i])]}
                   for i, pair in enumerate(pairs)]
        batch_triples.append(triples)

        events = []
        for t, v in groupby(triples, key=lambda x: next(iter(x.keys()))[0]):
            t_word = entity_types[b][t]
            t_start, t_end = entity_spans[b][t][0][0], entity_spans[b][t][0][1]
            event_type = t_word.split('.TRIGGER')[0]
            arguments = []
            for d in v:
                dic = next(iter(d.items()))
                o, r = dic[0][1], dic[1]
                if r in feasible_roles.get(event_type, ()):
                    a_start = entity_spans[b][o][0][0]
                    a_end = entity_spans[b][o][0][1]
                    arguments.append({
                        'entity_id': entity_ids[b][o], 'role': r,
                        'text': ''.join(i.strip('##') if '##' in i else ' ' + i
                                        for i in batch_text[b][a_start:a_end]).lstrip(),
                        'start': a_start, 'end': a_end})
            events.append({
                'id': entity_ids[b][t], 'event_type': event_type,
                'trigger': {'start': t_start, 'end': t_end,
                            'text': ''.join(i.strip('##') if '##' in i else ' ' + i
                                            for i in batch_text[b][t_start:t_end]).lstrip()},
                'arguments': arguments})
        batch_events.append(events)

    # eval mode: counter stays 0 (losses only accumulate under self.training)
    if counter == 0:
        out = (mention_loss, argex_loss, -argex_loss, [])
    else:
        out = (mention_loss, argex_loss, (mention_loss + argex_loss) / counter,
               batch_events)
    return out, batch_triples, batch_events, debug


# ----------------------------------------------------------------------------
if __name__ == "__main__":
    key = jax.random.PRNGKey(0)
    k1, k2, k3, k4, k5 = jax.random.split(key, 5)

    B, L, NH, H = 2, 128, 12, HIDDEN

    # deterministic "parameters" (matching the module's __init__ shapes)
    params = {
        'entity_anchor': jax.random.uniform(k1, (N_ANCHOR, H), jnp.float32, -1.0, 1.0),
        'relation_embeddings': jax.random.uniform(k2, (N_REL, 3 * H), jnp.float32, -1.0, 1.0),
        'nota_embeddings': jax.random.uniform(k3, (N_NOTA, 3 * H), jnp.float32, -1.0, 1.0),
    }

    # deterministic "encoder outputs" (stand-in for process_long_input / BERT)
    sequence_output = jax.random.normal(k4, (B, L, H), jnp.float32)
    attention = jax.nn.softmax(jax.random.normal(k5, (B, NH, L, L), jnp.float32), axis=-1)

    relation_types = ["NOTA"] + [f"role_{i}" for i in range(N_REL)]
    event_types = ["Conflict.Attack", "Life.Die", "Movement.Transport"]
    feasible_roles = {et: set(relation_types[1:]) for et in event_types}

    entity_spans = [
        [[[2, 5]], [[10, 13]], [[20, 22]], [[30, 34]]],
        [[[1, 3]], [[8, 12]], [[40, 45]]],
    ]
    entity_types = [
        ["Conflict.Attack.TRIGGER", "PER", "ORG", "Life.Die.TRIGGER"],
        ["Movement.Transport.TRIGGER", "PER", "VEH"],
    ]
    entity_ids = [["e0", "e1", "e2", "e3"], ["e0", "e1", "e2"]]
    batch_text = [[f"tok{i}" for i in range(L)] for _ in range(B)]

    out, batch_triples, batch_events, debug = encoder_forward(
        sequence_output, attention, entity_spans, entity_types, entity_ids,
        batch_text, params, relation_types, feasible_roles)

    jax.block_until_ready(out[2])

    # verify the Pallas hot path against a pure-JAX reference
    for (b, spans, pairs, scores) in debug:
        flat_spans = [(sp[0][0], sp[0][1]) for sp in spans]
        ref = np.asarray(_reference(sequence_output[b], attention[b], flat_spans,
                                    pairs, params['relation_embeddings'],
                                    params['nota_embeddings']))
        got = np.asarray(scores)
        if not np.allclose(got, ref, rtol=2e-2, atol=1e-1):
            raise AssertionError(f"scores mismatch on batch item {b}")
        # predictions must agree wherever the reference is not a near-tie
        srt = np.sort(ref, axis=-1)
        margin = srt[:, -1] - srt[:, -2]
        agree = np.argmax(got, -1) == np.argmax(ref, -1)
        if not np.all(agree | (margin < 0.2)):
            raise AssertionError(f"prediction mismatch on batch item {b}")

    print("KERNEL_OK")
</pallas_src>

<mosaic_0001>
module attributes {stable_mosaic.version = 11 : i64} {
  func.func @_entity_embed_kernel(%arg0: memref<16x1xi32, #tpu.memory_space<vmem>>, %arg1: memref<16x1xi32, #tpu.memory_space<vmem>>, %arg2: memref<128x768xf32, #tpu.memory_space<vmem>>, %arg3: memref<768x256xf32, #tpu.memory_space<vmem>>, %arg4: memref<768x128xf32, #tpu.memory_space<vmem>>, %arg5: memref<16x256xf32, #tpu.memory_space<vmem>>, %arg6: memref<128x128xf32, #tpu.memory_space<vmem>>, %arg7: memref<16x128xbf16, #tpu.memory_space<vmem>>) attributes {dimension_semantics = [], scalar_prefetch = 0 : i64, scratch_operands = 0 : i64, tpu.core_type = #tpu.core_type<tc>} {
    %c0 = arith.constant 0 : index
    %c0_0 = arith.constant 0 : index
    %0 = vector.load %arg0[%c0, %c0_0] : memref<16x1xi32, #tpu.memory_space<vmem>>, vector<16x1xi32>
    %c0_1 = arith.constant 0 : index
    %c0_2 = arith.constant 0 : index
    %1 = vector.load %arg1[%c0_1, %c0_2] : memref<16x1xi32, #tpu.memory_space<vmem>>, vector<16x1xi32>
    %2 = tpu.iota {dimensions = array<i32: 1>} : vector<16x128xi32>
    %3 = arith.subi %1, %0 : vector<16x1xi32>
    %c1_i32 = arith.constant 1 : i32
    %4 = vector.broadcast %c1_i32 : i32 to vector<16x1xi32>
    %5 = arith.maxsi %3, %4 : vector<16x1xi32>
    %6 = arith.sitofp %5 : vector<16x1xi32> to vector<16x1xf32>
    %7 = vector.broadcast %0 : vector<16x1xi32> to vector<16x128xi32>
    %8 = arith.cmpi sge, %2, %7 : vector<16x128xi32>
    %9 = vector.broadcast %1 : vector<16x1xi32> to vector<16x128xi32>
    %10 = arith.cmpi slt, %2, %9 : vector<16x128xi32>
    %11 = arith.andi %8, %10 : vector<16x128xi1>
    %cst = arith.constant 1.000000e+00 : f32
    %12 = vector.broadcast %cst : f32 to vector<16x1xf32>
    %13 = arith.divf %12, %6 : vector<16x1xf32>
    %cst_3 = arith.constant 0.000000e+00 : f32
    %14 = vector.shape_cast %13 : vector<16x1xf32> to vector<16x1xf32>
    %15 = vector.broadcast %14 : vector<16x1xf32> to vector<16x128xf32>
    %16 = vector.broadcast %cst_3 : f32 to vector<16x128xf32>
    %17 = arith.select %11, %15, %16 : vector<16x128xi1>, vector<16x128xf32>
    %c0_4 = arith.constant 0 : index
    %c0_5 = arith.constant 0 : index
    %18 = vector.load %arg2[%c0_4, %c0_5] : memref<128x768xf32, #tpu.memory_space<vmem>>, vector<128x768xf32>
    %cst_6 = arith.constant dense<0.000000e+00> : vector<16x768xf32>
    %19 = tpu.matmul %17, %18, %cst_6 {dimension_numbers = #tpu.dot_dimension_numbers<[1], [0], [0], [1], [0, 0, 1, 1], [], []>} : vector<16x128xf32>, vector<128x768xf32>, vector<16x768xf32> -> vector<16x768xf32>
    %c0_7 = arith.constant 0 : index
    %c0_8 = arith.constant 0 : index
    %20 = vector.load %arg3[%c0_7, %c0_8] : memref<768x256xf32, #tpu.memory_space<vmem>>, vector<768x256xf32>
    %cst_9 = arith.constant dense<0.000000e+00> : vector<16x256xf32>
    %21 = tpu.matmul %19, %20, %cst_9 {dimension_numbers = #tpu.dot_dimension_numbers<[1], [0], [0], [1], [0, 0, 1, 1], [], []>} : vector<16x768xf32>, vector<768x256xf32>, vector<16x256xf32> -> vector<16x256xf32>
    %c0_10 = arith.constant 0 : index
    %c0_11 = arith.constant 0 : index
    %22 = vector.load %arg5[%c0_10, %c0_11] : memref<16x256xf32, #tpu.memory_space<vmem>>, vector<16x256xf32>
    tpu.vector_store %arg5[%c0_10, %c0_11], %21 {strides = array<i32>} : memref<16x256xf32, #tpu.memory_space<vmem>>, vector<16x256xf32>,
    %c0_12 = arith.constant 0 : index
    %c0_13 = arith.constant 0 : index
    %23 = vector.load %arg2[%c0_12, %c0_13] : memref<128x768xf32, #tpu.memory_space<vmem>>, vector<128x768xf32>
    %c0_14 = arith.constant 0 : index
    %c0_15 = arith.constant 0 : index
    %24 = vector.load %arg4[%c0_14, %c0_15] : memref<768x128xf32, #tpu.memory_space<vmem>>, vector<768x128xf32>
    %cst_16 = arith.constant dense<0.000000e+00> : vector<128x128xf32>
    %25 = tpu.matmul %23, %24, %cst_16 {dimension_numbers = #tpu.dot_dimension_numbers<[1], [0], [0], [1], [0, 0, 1, 1], [], []>} : vector<128x768xf32>, vector<768x128xf32>, vector<128x128xf32> -> vector<128x128xf32>
    %c0_17 = arith.constant 0 : index
    %c0_18 = arith.constant 0 : index
    %26 = vector.load %arg6[%c0_17, %c0_18] : memref<128x128xf32, #tpu.memory_space<vmem>>, vector<128x128xf32>
    tpu.vector_store %arg6[%c0_17, %c0_18], %25 {strides = array<i32>} : memref<128x128xf32, #tpu.memory_space<vmem>>, vector<128x128xf32>,
    %27 = arith.truncf %17 : vector<16x128xf32> to vector<16x128xbf16>
    %c0_19 = arith.constant 0 : index
    %c0_20 = arith.constant 0 : index
    %28 = vector.load %arg7[%c0_19, %c0_20] : memref<16x128xbf16, #tpu.memory_space<vmem>>, vector<16x128xbf16>
    tpu.vector_store %arg7[%c0_19, %c0_20], %27 {strides = array<i32>} : memref<16x128xbf16, #tpu.memory_space<vmem>>, vector<16x128xbf16>,
    return
  }
}

</mosaic_0001>

<llo_original>
// kernel: tpu_custom_call.1
$region0: #{tpu_custom_call.1}
  #allocation0 [shape = 'u32[]', space=smem, size = 0x4, offset = 0x4, fixed_abs, tag = 'smem constant byte address 0x4 - core index']
  #allocation1 [shape = 'u32[144,128]{1,0:T(1,128)}', space=vmem, size = 0x12000, scoped, tag = 'internal scratch']
  %s0 = inlined_call_operand.vmem [shape: s32[16,1], index: 0, kind: input, shape index: {}]
  %s1 = inlined_call_operand.vmem [shape: s32[16,1], index: 1, kind: input, shape index: {}]
  %s2 = inlined_call_operand.hbm [shape: f32[128,768], index: 2, kind: input, shape index: {}]
  %s3 = inlined_call_operand.hbm [shape: f32[768,256], index: 3, kind: input, shape index: {}]
  %s4 = inlined_call_operand.hbm [shape: f32[768,128], index: 4, kind: input, shape index: {}]
  %s5 = inlined_call_operand.hbm [shape: f32[16,256], index: 5, kind: output, shape index: {0}]
  %s6 = inlined_call_operand.hbm [shape: f32[128,128], index: 6, kind: output, shape index: {1}]
  %s7 = inlined_call_operand.hbm [shape: bf16[16,128], index: 7, kind: output, shape index: {2}]
  %8 = xla_tuple %s5, %s6, %s7
  %s9 = sld [smem:[#allocation0]]
  $region58: #{tpu_custom_call.1} parent=0
    _
  %s11 = ssub.s32 1, %s9
  %s12 = scalar_select 0, %s11, %s9
  $region1: #{tpu_custom_call.1} parent=0
    #allocation2 [shape = 'u8[393216]{0}', space=vmem, size = 0x60000, scoped, tag = 'input window, operand 2, single buffered']
    #allocation3 [shape = 's32[1]{0}', space=sflag, size = 0x4, scoped, tag = 'scoped memory for tpu_custom_call.1']
    #allocation4 [shape = 's32[1]{0}', space=sflag, size = 0x4, scoped, tag = 'scoped memory for tpu_custom_call.1']
    #allocation5 [shape = 'u8[786432]{0}', space=vmem, size = 0xc0000, scoped, tag = 'input window, operand 3, single buffered']
    #allocation6 [shape = 's32[1]{0}', space=sflag, size = 0x4, scoped, tag = 'scoped memory for tpu_custom_call.1']
    #allocation7 [shape = 'u8[393216]{0}', space=vmem, size = 0x60000, scoped, tag = 'input window, operand 4, single buffered']
    #allocation8 [shape = 'u8[16384]{0}', space=vmem, size = 0x4000, scoped, tag = 'output window, operand 0, single buffered']
    #allocation9 [shape = 'u8[65536]{0}', space=vmem, size = 0x10000, scoped, tag = 'output window, operand 1, single buffered']
    #allocation10 [shape = 's32[1]{0}', space=sflag, size = 0x4, scoped, tag = 'scoped memory for tpu_custom_call.1']
    #allocation11 [shape = 'u8[4096]{0}', space=vmem, size = 0x1000, scoped, tag = 'output window, operand 2, single buffered']
    %13 = vsyncpa [#allocation3], 0
    %14 = vsyncpa [#allocation6], 0
    %15 = vsyncpa [#allocation4], 0
    %16 = vsyncpa [#allocation10], 0
    // Predicated region
    $region2: #{tpu_custom_call.1} parent=1 // pred_check
      _
    $region3: #{tpu_custom_call.1} parent=1 // pred_check_branch
      %18 = sbr.rel (0) target = $region5
    $region4: #{tpu_custom_call.1} parent=1 // pred_region
      _
    $region5: #{tpu_custom_call.1} parent=1 // pred_fallthru
      _
    // Predicated region
    $region6: #{tpu_custom_call.1} parent=1 // pred_check
      _
    $region7: #{tpu_custom_call.1} parent=1 // pred_check_branch
      %20 = sbr.rel (0) target = $region9
    $region8: #{tpu_custom_call.1} parent=1 // pred_region
      _
    $region9: #{tpu_custom_call.1} parent=1 // pred_fallthru
      _
    // Predicated region
    $region10: #{tpu_custom_call.1} parent=1 // pred_check
      _
    $region11: #{tpu_custom_call.1} parent=1 // pred_check_branch
      %22 = sbr.rel (0) target = $region13
    $region12: #{tpu_custom_call.1} parent=1 // pred_region
      %s24 = ssub.s32 12288, 12288
      %25 = vsyncadd [#allocation3], %s24
      %s26 = sshll.u32 [#allocation2], 4
      %s27 = int_to_ptr.vmem [resolvable:$true] %s26
      %32 = dma.hbm_to_vmem [thread:$0]  %s2, 12288, %s27, [#allocation3], 768, 768, 48
    $region13: #{tpu_custom_call.1} parent=1 // pred_fallthru
      _
    // Predicated region
    $region14: #{tpu_custom_call.1} parent=1 // pred_check
      _
    $region15: #{tpu_custom_call.1} parent=1 // pred_check_branch
      %34 = sbr.rel (0) target = $region17
    $region16: #{tpu_custom_call.1} parent=1 // pred_region
      %s36 = ssub.s32 24576, 24576
      %37 = vsyncadd [#allocation6], %s36
      %s38 = sshll.u32 [#allocation5], 4
      %s39 = int_to_ptr.vmem [resolvable:$true] %s38
      %44 = dma.hbm_to_vmem [thread:$0]  %s3, 24576, %s39, [#allocation6], 256, 256, 16
    $region17: #{tpu_custom_call.1} parent=1 // pred_fallthru
      _
    // Predicated region
    $region18: #{tpu_custom_call.1} parent=1 // pred_check
      _
    $region19: #{tpu_custom_call.1} parent=1 // pred_check_branch
      %46 = sbr.rel (0) target = $region21
    $region20: #{tpu_custom_call.1} parent=1 // pred_region
      %s48 = ssub.s32 12288, 12288
      %49 = vsyncadd [#allocation6], %s48
      %s50 = sshll.u32 [#allocation7], 4
      %s51 = int_to_ptr.vmem [resolvable:$true] %s50
      %56 = dma.hbm_to_vmem [thread:$0]  %s4, 12288, %s51, [#allocation6], 128, 128, 8
    $region21: #{tpu_custom_call.1} parent=1 // pred_fallthru
      _
    // Predicated region
    $region22: #{tpu_custom_call.1} parent=1 // pred_check
      _
    $region23: #{tpu_custom_call.1} parent=1 // pred_check_branch
      %58 = sbr.rel (0) target = $region25
    $region24: #{tpu_custom_call.1} parent=1 // pred_region
      %59 = dma.done [#allocation3], 12288
    $region25: #{tpu_custom_call.1} parent=1 // pred_fallthru
      _
    // Predicated region
    $region26: #{tpu_custom_call.1} parent=1 // pred_check
      _
    $region27: #{tpu_custom_call.1} parent=1 // pred_check_branch
      %61 = sbr.rel (0) target = $region29
    $region28: #{tpu_custom_call.1} parent=1 // pred_region
      %62 = dma.done [#allocation6], 24576
    $region29: #{tpu_custom_call.1} parent=1 // pred_fallthru
      _
    // Predicated region
    $region30: #{tpu_custom_call.1} parent=1 // pred_check
      _
    $region31: #{tpu_custom_call.1} parent=1 // pred_check_branch
      %64 = sbr.rel (0) target = $region33
    $region32: #{tpu_custom_call.1} parent=1 // pred_region
      %65 = dma.done [#allocation6], 12288
    $region33: #{tpu_custom_call.1} parent=1 // pred_fallthru
      _
    %v66 = vld [vmem:[%s0] sm:$0xff]
    %v67 = vld [vmem:[%s0 + $0x8] sm:$0xff]
    %v68 = vld [vmem:[%s1] sm:$0xff]
    %v69 = vld [vmem:[%s1 + $0x8] sm:$0xff]
    %v70 = vlaneseq
    %v71 = vand.u32 %v70, 127
    %v72 = vsub.s32 %v68, %v66
    %v73 = vsub.s32 %v69, %v67
    %vm74 = vcmp.gt.s32.totalorder %v72, 1
    %v75 = vsel %vm74, %v72, 1
    %vm76 = vcmp.gt.s32.totalorder %v73, 1
    %v77 = vsel %vm76, %v73, 1
    %v78 = vcvt.s32.f32 %v75
    %v79 = vcvt.s32.f32 %v77
    %80 = vset.pattern.permute.xlu0 0
    %81 = vperm.xlu0 %80, %v66
    %v82 = vpop.permute.xlu0 %81
    %83 = vset.pattern.permute.xlu0 0
    %84 = vperm.xlu0 %83, %v67
    %v85 = vpop.permute.xlu0 %84
    %vm86 = vcmp.ge.s32.totalorder %v71, %v82
    %vm87 = vcmp.ge.s32.totalorder %v71, %v85
    %88 = vset.pattern.permute.xlu0 0
    %89 = vperm.xlu0 %88, %v68
    %v90 = vpop.permute.xlu0 %89
    %91 = vset.pattern.permute.xlu0 0
    %92 = vperm.xlu0 %91, %v69
    %v93 = vpop.permute.xlu0 %92
    %vm94 = vcmp.lt.s32.totalorder %v71, %v90
    %vm95 = vcmp.lt.s32.totalorder %v71, %v93
    %vm96 = vmand %vm86, %vm94
    %vm97 = vmand %vm87, %vm95
    %v98 = vrcp.pop %v78
    %v99 = vmul.f32 1.0, %v98
    %v100 = vrcp.pop %v79
    %v101 = vmul.f32 1.0, %v100
    %103 = vset.pattern.permute.xlu0 0
    %104 = vperm.xlu0 %103, %v99
    %v105 = vpop.permute.xlu0 %104
    %108 = vset.pattern.permute.xlu0 0
    %109 = vperm.xlu0 %108, %v101
    %v110 = vpop.permute.xlu0 %109
    %v112 = vsel %vm96, %v105, 0.0
    %v113 = vsel %vm97, %v110, 0.0
    %v114 = vld [vmem:[#allocation2] sm:$0xff]
    %v115 = vld [vmem:[#allocation2 + $0x8] sm:$0xff]
    %v116 = vld [vmem:[#allocation2 + $0x10] sm:$0xff]
    %v117 = vld [vmem:[#allocation2 + $0x18] sm:$0xff]
    %v118 = vld [vmem:[#allocation2 + $0x20] sm:$0xff]
    %v119 = vld [vmem:[#allocation2 + $0x28] sm:$0xff]
    %v120 = vld [vmem:[#allocation2 + $0x30] sm:$0xff]
    %v121 = vld [vmem:[#allocation2 + $0x38] sm:$0xff]
    %v122 = vld [vmem:[#allocation2 + $0x40] sm:$0xff]
    %v123 = vld [vmem:[#allocation2 + $0x48] sm:$0xff]
    %v124 = vld [vmem:[#allocation2 + $0x50] sm:$0xff]
    %v125 = vld [vmem:[#allocation2 + $0x58] sm:$0xff]
    %v126 = vld [vmem:[#allocation2 + $0x60] sm:$0xff]
    %v127 = vld [vmem:[#allocation2 + $0x68] sm:$0xff]
    %v128 = vld [vmem:[#allocation2 + $0x70] sm:$0xff]
    %v129 = vld [vmem:[#allocation2 + $0x78] sm:$0xff]
    %v130 = vld [vmem:[#allocation2 + $0x80] sm:$0xff]
    %v131 = vld [vmem:[#allocation2 + $0x88] sm:$0xff]
    %v132 = vld [vmem:[#allocation2 + $0x90] sm:$0xff]
    %v133 = vld [vmem:[#allocation2 + $0x98] sm:$0xff]
    %v134 = vld [vmem:[#allocation2 + $0xa0] sm:$0xff]
    %v135 = vld [vmem:[#allocation2 + $0xa8] sm:$0xff]
    %v136 = vld [vmem:[#allocation2 + $0xb0] sm:$0xff]
    %v137 = vld [vmem:[#allocation2 + $0xb8] sm:$0xff]
    %v138 = vld [vmem:[#allocation2 + $0xc0] sm:$0xff]
    %v139 = vld [vmem:[#allocation2 + $0xc8] sm:$0xff]
    %v140 = vld [vmem:[#allocation2 + $0xd0] sm:$0xff]
    %v141 = vld [vmem:[#allocation2 + $0xd8] sm:$0xff]
    %v142 = vld [vmem:[#allocation2 + $0xe0] sm:$0xff]
    %v143 = vld [vmem:[#allocation2 + $0xe8] sm:$0xff]
    %v144 = vld [vmem:[#allocation2 + $0xf0] sm:$0xff]
    %v145 = vld [vmem:[#allocation2 + $0xf8] sm:$0xff]
    %v146 = vld [vmem:[#allocation2 + $0x100] sm:$0xff]
    %v147 = vld [vmem:[#allocation2 + $0x108] sm:$0xff]
    %v148 = vld [vmem:[#allocation2 + $0x110] sm:$0xff]
    %v149 = vld [vmem:[#allocation2 + $0x118] sm:$0xff]
    %v150 = vld [vmem:[#allocation2 + $0x120] sm:$0xff]
    %v151 = vld [vmem:[#allocation2 + $0x128] sm:$0xff]
    %v152 = vld [vmem:[#allocation2 + $0x130] sm:$0xff]
    %v153 = vld [vmem:[#allocation2 + $0x138] sm:$0xff]
    %v154 = vld [vmem:[#allocation2 + $0x140] sm:$0xff]
    %v155 = vld [vmem:[#allocation2 + $0x148] sm:$0xff]
    %v156 = vld [vmem:[#allocation2 + $0x150] sm:$0xff]
    %v157 = vld [vmem:[#allocation2 + $0x158] sm:$0xff]
    %v158 = vld [vmem:[#allocation2 + $0x160] sm:$0xff]
    %v159 = vld [vmem:[#allocation2 + $0x168] sm:$0xff]
    %v160 = vld [vmem:[#allocation2 + $0x170] sm:$0xff]
    %v161 = vld [vmem:[#allocation2 + $0x178] sm:$0xff]
    %v162 = vld [vmem:[#allocation2 + $0x180] sm:$0xff]
    %v163 = vld [vmem:[#allocation2 + $0x188] sm:$0xff]
    %v164 = vld [vmem:[#allocation2 + $0x190] sm:$0xff]
    %v165 = vld [vmem:[#allocation2 + $0x198] sm:$0xff]
    %v166 = vld [vmem:[#allocation2 + $0x1a0] sm:$0xff]
    %v167 = vld [vmem:[#allocation2 + $0x1a8] sm:$0xff]
    %v168 = vld [vmem:[#allocation2 + $0x1b0] sm:$0xff]
    %v169 = vld [vmem:[#allocation2 + $0x1b8] sm:$0xff]
    %v170 = vld [vmem:[#allocation2 + $0x1c0] sm:$0xff]
    %v171 = vld [vmem:[#allocation2 + $0x1c8] sm:$0xff]
    %v172 = vld [vmem:[#allocation2 + $0x1d0] sm:$0xff]
    %v173 = vld [vmem:[#allocation2 + $0x1d8] sm:$0xff]
    %v174 = vld [vmem:[#allocation2 + $0x1e0] sm:$0xff]
    %v175 = vld [vmem:[#allocation2 + $0x1e8] sm:$0xff]
    %v176 = vld [vmem:[#allocation2 + $0x1f0] sm:$0xff]
    %v177 = vld [vmem:[#allocation2 + $0x1f8] sm:$0xff]
    %v178 = vld [vmem:[#allocation2 + $0x200] sm:$0xff]
    %v179 = vld [vmem:[#allocation2 + $0x208] sm:$0xff]
    %v180 = vld [vmem:[#allocation2 + $0x210] sm:$0xff]
    %v181 = vld [vmem:[#allocation2 + $0x218] sm:$0xff]
    %v182 = vld [vmem:[#allocation2 + $0x220] sm:$0xff]
    %v183 = vld [vmem:[#allocation2 + $0x228] sm:$0xff]
    %v184 = vld [vmem:[#allocation2 + $0x230] sm:$0xff]
    %v185 = vld [vmem:[#allocation2 + $0x238] sm:$0xff]
    %v186 = vld [vmem:[#allocation2 + $0x240] sm:$0xff]
    %v187 = vld [vmem:[#allocation2 + $0x248] sm:$0xff]
    %v188 = vld [vmem:[#allocation2 + $0x250] sm:$0xff]
    %v189 = vld [vmem:[#allocation2 + $0x258] sm:$0xff]
    %v190 = vld [vmem:[#allocation2 + $0x260] sm:$0xff]
    %v191 = vld [vmem:[#allocation2 + $0x268] sm:$0xff]
    %v192 = vld [vmem:[#allocation2 + $0x270] sm:$0xff]
    %v193 = vld [vmem:[#allocation2 + $0x278] sm:$0xff]
    %v194 = vld [vmem:[#allocation2 + $0x280] sm:$0xff]
    %v195 = vld [vmem:[#allocation2 + $0x288] sm:$0xff]
    %v196 = vld [vmem:[#allocation2 + $0x290] sm:$0xff]
    %v197 = vld [vmem:[#allocation2 + $0x298] sm:$0xff]
    %v198 = vld [vmem:[#allocation2 + $0x2a0] sm:$0xff]
    %v199 = vld [vmem:[#allocation2 + $0x2a8] sm:$0xff]
    %v200 = vld [vmem:[#allocation2 + $0x2b0] sm:$0xff]
    %v201 = vld [vmem:[#allocation2 + $0x2b8] sm:$0xff]
    %v202 = vld [vmem:[#allocation2 + $0x2c0] sm:$0xff]
    %v203 = vld [vmem:[#allocation2 + $0x2c8] sm:$0xff]
    %v204 = vld [vmem:[#allocation2 + $0x2d0] sm:$0xff]
    %v205 = vld [vmem:[#allocation2 + $0x2d8] sm:$0xff]
    %v206 = vld [vmem:[#allocation2 + $0x2e0] sm:$0xff]
    %v207 = vld [vmem:[#allocation2 + $0x2e8] sm:$0xff]
    %v208 = vld [vmem:[#allocation2 + $0x2f0] sm:$0xff]
    %v209 = vld [vmem:[#allocation2 + $0x2f8] sm:$0xff]
    %210 = vmatprep.subr.mxu0 %v115
    %211 = vmatpush1.msra.mxu0 %v114
    %212 = vmatprep.subr.mxu0 %v121
    %213 = vmatpush1.msra.mxu0 %v120
    %214 = vmatprep.subr.mxu0 %v127
    %215 = vmatpush1.msra.mxu0 %v126
    %216 = vmatprep.subr.mxu0 %v133
    %217 = vmatpush1.msra.mxu0 %v132
    %218 = vmatprep.subr.mxu0 %v139
    %219 = vmatpush1.msra.mxu0 %v138
    %220 = vmatprep.subr.mxu0 %v145
    %221 = vmatpush1.msra.mxu0 %v144
    %222 = vmatprep.subr.mxu0 %v151
    %223 = vmatpush1.msra.mxu0 %v150
    %224 = vmatprep.subr.mxu0 %v157
    %225 = vmatpush1.msra.mxu0 %v156
    %226 = vmatprep.subr.mxu0 %v163
    %227 = vmatpush1.msra.mxu0 %v162
    %228 = vmatprep.subr.mxu0 %v169
    %229 = vmatpush1.msra.mxu0 %v168
    %230 = vmatprep.subr.mxu0 %v175
    %231 = vmatpush1.msra.mxu0 %v174
    %232 = vmatprep.subr.mxu0 %v181
    %233 = vmatpush1.msra.mxu0 %v180
    %234 = vmatprep.subr.mxu0 %v187
    %235 = vmatpush1.msra.mxu0 %v186
    %236 = vmatprep.subr.mxu0 %v193
    %237 = vmatpush1.msra.mxu0 %v192
    %238 = vmatprep.subr.mxu0 %v199
    %239 = vmatpush1.msra.mxu0 %v198
    %240 = vmatprep.subr.mxu0 %v205
    %241 = vmatpush1.msra.mxu0 %v204
    %242 = vmatprep.subr.mxu0 0.0
    %243 = vmatpush1.msra.mxu0 0.0
    %244 = vmatprep.subr.mxu0 0.0
    %245 = vmatpush1.msra.mxu0 0.0
    %246 = vmatprep.subr.mxu0 0.0
    %247 = vmatpush1.msra.mxu0 0.0
    %248 = vmatprep.subr.mxu0 0.0
    %249 = vmatpush1.msra.mxu0 0.0
    %250 = vmatprep.subr.mxu0 0.0
    %251 = vmatpush1.msra.mxu0 0.0
    %252 = vmatprep.subr.mxu0 0.0
    %253 = vmatpush1.msra.mxu0 0.0
    %254 = vmatprep.subr.mxu0 0.0
    %255 = vmatpush1.msra.mxu0 0.0
    %256 = vmatprep.subr.mxu0 0.0
    %257 = vmatpush1.msra.mxu0 0.0
    %258 = vmatprep.subr.mxu0 0.0
    %259 = vmatpush1.msra.mxu0 0.0
    %260 = vmatprep.subr.mxu0 0.0
    %261 = vmatpush1.msra.mxu0 0.0
    %262 = vmatprep.subr.mxu0 0.0
    %263 = vmatpush1.msra.mxu0 0.0
    %264 = vmatprep.subr.mxu0 0.0
    %265 = vmatpush1.msra.mxu0 0.0
    %266 = vmatprep.subr.mxu0 0.0
    %267 = vmatpush1.msra.mxu0 0.0
    %268 = vmatprep.subr.mxu0 0.0
    %269 = vmatpush1.msra.mxu0 0.0
    %270 = vmatprep.subr.mxu0 0.0
    %271 = vmatpush1.msra.mxu0 0.0
    %272 = vmatprep.subr.mxu0 0.0
    %273 = vmatpush1.msra.mxu0 0.0
    %274 = vmatprep.mubr.f32.mxu0 0.0
    %275 = vmatmul.mubr.f32.gmra.mrb[0].mxu0 %v112
    %v276 = vpop.f32.mrb[0].mxu0
    %v277 = vadd.f32 0.0, %v276
    %v278 = vpop.f32.mrb[0].mxu0
    %v279 = vadd.f32 0.0, %v278
    %280 = vmatprep.mubr.f32.mxu0 0.0
    %281 = vmatmul.mubr.f32.gmra.mrb[0].mxu0 %v113
    %v282 = vpop.f32.mrb[0].mxu0
    %v283 = vadd.f32 0.0, %v282
    %v284 = vpop.f32.mrb[0].mxu0
    %v285 = vadd.f32 0.0, %v284
    %286 = vdwg.mxu0
    %287 = vmatprep.subr.mxu0 %v117
    %288 = vmatpush1.msra.mxu0 %v116
    %289 = vmatprep.subr.mxu0 %v123
    %290 = vmatpush1.msra.mxu0 %v122
    %291 = vmatprep.subr.mxu0 %v129
    %292 = vmatpush1.msra.mxu0 %v128
    %293 = vmatprep.subr.mxu0 %v135
    %294 = vmatpush1.msra.mxu0 %v134
    %295 = vmatprep.subr.mxu0 %v141
    %296 = vmatpush1.msra.mxu0 %v140
    %297 = vmatprep.subr.mxu0 %v147
    %298 = vmatpush1.msra.mxu0 %v146
    %299 = vmatprep.subr.mxu0 %v153
    %300 = vmatpush1.msra.mxu0 %v152
    %301 = vmatprep.subr.mxu0 %v159
    %302 = vmatpush1.msra.mxu0 %v158
    %303 = vmatprep.subr.mxu0 %v165
    %304 = vmatpush1.msra.mxu0 %v164
    %305 = vmatprep.subr.mxu0 %v171
    %306 = vmatpush1.msra.mxu0 %v170
    %307 = vmatprep.subr.mxu0 %v177
    %308 = vmatpush1.msra.mxu0 %v176
    %309 = vmatprep.subr.mxu0 %v183
    %310 = vmatpush1.msra.mxu0 %v182
    %311 = vmatprep.subr.mxu0 %v189
    %312 = vmatpush1.msra.mxu0 %v188
    %313 = vmatprep.subr.mxu0 %v195
    %314 = vmatpush1.msra.mxu0 %v194
    %315 = vmatprep.subr.mxu0 %v201
    %316 = vmatpush1.msra.mxu0 %v200
    %317 = vmatprep.subr.mxu0 %v207
    %318 = vmatpush1.msra.mxu0 %v206
    %319 = vmatprep.subr.mxu0 0.0
    %320 = vmatpush1.msra.mxu0 0.0
    %321 = vmatprep.subr.mxu0 0.0
    %322 = vmatpush1.msra.mxu0 0.0
    %323 = vmatprep.subr.mxu0 0.0
    %324 = vmatpush1.msra.mxu0 0.0
    %325 = vmatprep.subr.mxu0 0.0
    %326 = vmatpush1.msra.mxu0 0.0
    %327 = vmatprep.subr.mxu0 0.0
    %328 = vmatpush1.msra.mxu0 0.0
    %329 = vmatprep.subr.mxu0 0.0
    %330 = vmatpush1.msra.mxu0 0.0
    %331 = vmatprep.subr.mxu0 0.0
    %332 = vmatpush1.msra.mxu0 0.0
    %333 = vmatprep.subr.mxu0 0.0
    %334 = vmatpush1.msra.mxu0 0.0
    %335 = vmatprep.subr.mxu0 0.0
    %336 = vmatpush1.msra.mxu0 0.0
    %337 = vmatprep.subr.mxu0 0.0
    %338 = vmatpush1.msra.mxu0 0.0
    %339 = vmatprep.subr.mxu0 0.0
    %340 = vmatpush1.msra.mxu0 0.0
    %341 = vmatprep.subr.mxu0 0.0
    %342 = vmatpush1.msra.mxu0 0.0
    %343 = vmatprep.subr.mxu0 0.0
    %344 = vmatpush1.msra.mxu0 0.0
    %345 = vmatprep.subr.mxu0 0.0
    %346 = vmatpush1.msra.mxu0 0.0
    %347 = vmatprep.subr.mxu0 0.0
    %348 = vmatpush1.msra.mxu0 0.0
    %349 = vmatprep.subr.mxu0 0.0
    %350 = vmatpush1.msra.mxu0 0.0
    %351 = vmatprep.mubr.f32.mxu0 0.0
    %352 = vmatmul.mubr.f32.gmra.mrb[0].mxu0 %v112
    %v353 = vpop.f32.mrb[0].mxu0
    %v354 = vadd.f32 0.0, %v353
    %v355 = vpop.f32.mrb[0].mxu0
    %v356 = vadd.f32 0.0, %v355
    %357 = vmatprep.mubr.f32.mxu0 0.0
    %358 = vmatmul.mubr.f32.gmra.mrb[0].mxu0 %v113
    %v359 = vpop.f32.mrb[0].mxu0
    %v360 = vadd.f32 0.0, %v359
    %v361 = vpop.f32.mrb[0].mxu0
    %v362 = vadd.f32 0.0, %v361
    %363 = vdwg.mxu0
    %364 = vmatprep.subr.mxu0 %v119
    %365 = vmatpush1.msra.mxu0 %v118
    %366 = vmatprep.subr.mxu0 %v125
    %367 = vmatpush1.msra.mxu0 %v124
    %368 = vmatprep.subr.mxu0 %v131
    %369 = vmatpush1.msra.mxu0 %v130
    %370 = vmatprep.subr.mxu0 %v137
    %371 = vmatpush1.msra.mxu0 %v136
    %372 = vmatprep.subr.mxu0 %v143
    %373 = vmatpush1.msra.mxu0 %v142
    %374 = vmatprep.subr.mxu0 %v149
    %375 = vmatpush1.msra.mxu0 %v148
    %376 = vmatprep.subr.mxu0 %v155
    %377 = vmatpush1.msra.mxu0 %v154
    %378 = vmatprep.subr.mxu0 %v161
    %379 = vmatpush1.msra.mxu0 %v160
    %380 = vmatprep.subr.mxu0 %v167
    %381 = vmatpush1.msra.mxu0 %v166
    %382 = vmatprep.subr.mxu0 %v173
    %383 = vmatpush1.msra.mxu0 %v172
    %384 = vmatprep.subr.mxu0 %v179
    %385 = vmatpush1.msra.mxu0 %v178
    %386 = vmatprep.subr.mxu0 %v185
    %387 = vmatpush1.msra.mxu0 %v184
    %388 = vmatprep.subr.mxu0 %v191
    %389 = vmatpush1.msra.mxu0 %v190
    %390 = vmatprep.subr.mxu0 %v197
    %391 = vmatpush1.msra.mxu0 %v196
    %392 = vmatprep.subr.mxu0 %v203
    %393 = vmatpush1.msra.mxu0 %v202
    %394 = vmatprep.subr.mxu0 %v209
    %395 = vmatpush1.msra.mxu0 %v208
    %396 = vmatprep.subr.mxu0 0.0
    %397 = vmatpush1.msra.mxu0 0.0
    %398 = vmatprep.subr.mxu0 0.0
    %399 = vmatpush1.msra.mxu0 0.0
    %400 = vmatprep.subr.mxu0 0.0
    %401 = vmatpush1.msra.mxu0 0.0
    %402 = vmatprep.subr.mxu0 0.0
    %403 = vmatpush1.msra.mxu0 0.0
    %404 = vmatprep.subr.mxu0 0.0
    %405 = vmatpush1.msra.mxu0 0.0
    %406 = vmatprep.subr.mxu0 0.0
    %407 = vmatpush1.msra.mxu0 0.0
    %408 = vmatprep.subr.mxu0 0.0
    %409 = vmatpush1.msra.mxu0 0.0
    %410 = vmatprep.subr.mxu0 0.0
    %411 = vmatpush1.msra.mxu0 0.0
    %412 = vmatprep.subr.mxu0 0.0
    %413 = vmatpush1.msra.mxu0 0.0
    %414 = vmatprep.subr.mxu0 0.0
    %415 = vmatpush1.msra.mxu0 0.0
    %416 = vmatprep.subr.mxu0 0.0
    %417 = vmatpush1.msra.mxu0 0.0
    %418 = vmatprep.subr.mxu0 0.0
    %419 = vmatpush1.msra.mxu0 0.0
    %420 = vmatprep.subr.mxu0 0.0
    %421 = vmatpush1.msra.mxu0 0.0
    %422 = vmatprep.subr.mxu0 0.0
    %423 = vmatpush1.msra.mxu0 0.0
    %424 = vmatprep.subr.mxu0 0.0
    %425 = vmatpush1.msra.mxu0 0.0
    %426 = vmatprep.subr.mxu0 0.0
    %427 = vmatpush1.msra.mxu0 0.0
    %428 = vmatprep.mubr.f32.mxu0 0.0
    %429 = vmatmul.mubr.f32.gmra.mrb[0].mxu0 %v112
    %v430 = vpop.f32.mrb[0].mxu0
    %v431 = vadd.f32 0.0, %v430
    %v432 = vpop.f32.mrb[0].mxu0
    %v433 = vadd.f32 0.0, %v432
    %434 = vmatprep.mubr.f32.mxu0 0.0
    %435 = vmatmul.mubr.f32.gmra.mrb[0].mxu0 %v113
    %v436 = vpop.f32.mrb[0].mxu0
    %v437 = vadd.f32 0.0, %v436
    %v438 = vpop.f32.mrb[0].mxu0
    %v439 = vadd.f32 0.0, %v438
    %440 = vdwg.mxu0
    %v441 = vld [vmem:[#allocation5] sm:$0xff]
    %v442 = vld [vmem:[#allocation5 + $0x8] sm:$0xff]
    %v443 = vld [vmem:[#allocation5 + $0x10] sm:$0xff]
    %v444 = vld [vmem:[#allocation5 + $0x18] sm:$0xff]
    %v445 = vld [vmem:[#allocation5 + $0x20] sm:$0xff]
    %v446 = vld [vmem:[#allocation5 + $0x28] sm:$0xff]
    %v447 = vld [vmem:[#allocation5 + $0x30] sm:$0xff]
    %v448 = vld [vmem:[#allocation5 + $0x38] sm:$0xff]
    %v449 = vld [vmem:[#allocation5 + $0x40] sm:$0xff]
    %v450 = vld [vmem:[#allocation5 + $0x48] sm:$0xff]
    %v451 = vld [vmem:[#allocation5 + $0x50] sm:$0xff]
    %v452 = vld [vmem:[#allocation5 + $0x58] sm:$0xff]
    %v453 = vld [vmem:[#allocation5 + $0x60] sm:$0xff]
    %v454 = vld [vmem:[#allocation5 + $0x68] sm:$0xff]
    %v455 = vld [vmem:[#allocation5 + $0x70] sm:$0xff]
    %v456 = vld [vmem:[#allocation5 + $0x78] sm:$0xff]
    %v457 = vld [vmem:[#allocation5 + $0x80] sm:$0xff]
    %v458 = vld [vmem:[#allocation5 + $0x88] sm:$0xff]
    %v459 = vld [vmem:[#allocation5 + $0x90] sm:$0xff]
    %v460 = vld [vmem:[#allocation5 + $0x98] sm:$0xff]
    %v461 = vld [vmem:[#allocation5 + $0xa0] sm:$0xff]
    %v462 = vld [vmem:[#allocation5 + $0xa8] sm:$0xff]
    %v463 = vld [vmem:[#allocation5 + $0xb0] sm:$0xff]
    %v464 = vld [vmem:[#allocation5 + $0xb8] sm:$0xff]
    %v465 = vld [vmem:[#allocation5 + $0xc0] sm:$0xff]
    %v466 = vld [vmem:[#allocation5 + $0xc8] sm:$0xff]
    %v467 = vld [vmem:[#allocation5 + $0xd0] sm:$0xff]
    %v468 = vld [vmem:[#allocation5 + $0xd8] sm:$0xff]
    %v469 = vld [vmem:[#allocation5 + $0xe0] sm:$0xff]
    %v470 = vld [vmem:[#allocation5 + $0xe8] sm:$0xff]
    %v471 = vld [vmem:[#allocation5 + $0xf0] sm:$0xff]
    %v472 = vld [vmem:[#allocation5 + $0xf8] sm:$0xff]
    %v473 = vld [vmem:[#allocation5 + $0x100] sm:$0xff]
    %v474 = vld [vmem:[#allocation5 + $0x108] sm:$0xff]
    %v475 = vld [vmem:[#allocation5 + $0x110] sm:$0xff]
    %v476 = vld [vmem:[#allocation5 + $0x118] sm:$0xff]
    %v477 = vld [vmem:[#allocation5 + $0x120] sm:$0xff]
    %v478 = vld [vmem:[#allocation5 + $0x128] sm:$0xff]
    %v479 = vld [vmem:[#allocation5 + $0x130] sm:$0xff]
    %v480 = vld [vmem:[#allocation5 + $0x138] sm:$0xff]
    %v481 = vld [vmem:[#allocation5 + $0x140] sm:$0xff]
    %v482 = vld [vmem:[#allocation5 + $0x148] sm:$0xff]
    %v483 = vld [vmem:[#allocation5 + $0x150] sm:$0xff]
    %v484 = vld [vmem:[#allocation5 + $0x158] sm:$0xff]
    %v485 = vld [vmem:[#allocation5 + $0x160] sm:$0xff]
    %v486 = vld [vmem:[#allocation5 + $0x168] sm:$0xff]
    %v487 = vld [vmem:[#allocation5 + $0x170] sm:$0xff]
    %v488 = vld [vmem:[#allocation5 + $0x178] sm:$0xff]
    %v489 = vld [vmem:[#allocation5 + $0x180] sm:$0xff]
    %v490 = vld [vmem:[#allocation5 + $0x188] sm:$0xff]
    %v491 = vld [vmem:[#allocation5 + $0x190] sm:$0xff]
    %v492 = vld [vmem:[#allocation5 + $0x198] sm:$0xff]
    %v493 = vld [vmem:[#allocation5 + $0x1a0] sm:$0xff]
    %v494 = vld [vmem:[#allocation5 + $0x1a8] sm:$0xff]
    %v495 = vld [vmem:[#allocation5 + $0x1b0] sm:$0xff]
    %v496 = vld [vmem:[#allocation5 + $0x1b8] sm:$0xff]
    %v497 = vld [vmem:[#allocation5 + $0x1c0] sm:$0xff]
    %v498 = vld [vmem:[#allocation5 + $0x1c8] sm:$0xff]
    %v499 = vld [vmem:[#allocation5 + $0x1d0] sm:$0xff]
    %v500 = vld [vmem:[#allocation5 + $0x1d8] sm:$0xff]
    %v501 = vld [vmem:[#allocation5 + $0x1e0] sm:$0xff]
    %v502 = vld [vmem:[#allocation5 + $0x1e8] sm:$0xff]
    %v503 = vld [vmem:[#allocation5 + $0x1f0] sm:$0xff]
    %v504 = vld [vmem:[#allocation5 + $0x1f8] sm:$0xff]
    %v505 = vld [vmem:[#allocation5 + $0x200] sm:$0xff]
    %v506 = vld [vmem:[#allocation5 + $0x208] sm:$0xff]
    %v507 = vld [vmem:[#allocation5 + $0x210] sm:$0xff]
    %v508 = vld [vmem:[#allocation5 + $0x218] sm:$0xff]
    %v509 = vld [vmem:[#allocation5 + $0x220] sm:$0xff]
    %v510 = vld [vmem:[#allocation5 + $0x228] sm:$0xff]
    %v511 = vld [vmem:[#allocation5 + $0x230] sm:$0xff]
    %v512 = vld [vmem:[#allocation5 + $0x238] sm:$0xff]
    %v513 = vld [vmem:[#allocation5 + $0x240] sm:$0xff]
    %v514 = vld [vmem:[#allocation5 + $0x248] sm:$0xff]
    %v515 = vld [vmem:[#allocation5 + $0x250] sm:$0xff]
    %v516 = vld [vmem:[#allocation5 + $0x258] sm:$0xff]
    %v517 = vld [vmem:[#allocation5 + $0x260] sm:$0xff]
    %v518 = vld [vmem:[#allocation5 + $0x268] sm:$0xff]
    %v519 = vld [vmem:[#allocation5 + $0x270] sm:$0xff]
    %v520 = vld [vmem:[#allocation5 + $0x278] sm:$0xff]
    %v521 = vld [vmem:[#allocation5 + $0x280] sm:$0xff]
    %v522 = vld [vmem:[#allocation5 + $0x288] sm:$0xff]
    %v523 = vld [vmem:[#allocation5 + $0x290] sm:$0xff]
    %v524 = vld [vmem:[#allocation5 + $0x298] sm:$0xff]
    %v525 = vld [vmem:[#allocation5 + $0x2a0] sm:$0xff]
    %v526 = vld [vmem:[#allocation5 + $0x2a8] sm:$0xff]
    %v527 = vld [vmem:[#allocation5 + $0x2b0] sm:$0xff]
    %v528 = vld [vmem:[#allocation5 + $0x2b8] sm:$0xff]
    %v529 = vld [vmem:[#allocation5 + $0x2c0] sm:$0xff]
    %v530 = vld [vmem:[#allocation5 + $0x2c8] sm:$0xff]
    %v531 = vld [vmem:[#allocation5 + $0x2d0] sm:$0xff]
    %v532 = vld [vmem:[#allocation5 + $0x2d8] sm:$0xff]
    %v533 = vld [vmem:[#allocation5 + $0x2e0] sm:$0xff]
    %v534 = vld [vmem:[#allocation5 + $0x2e8] sm:$0xff]
    %v535 = vld [vmem:[#allocation5 + $0x2f0] sm:$0xff]
    %v536 = vld [vmem:[#allocation5 + $0x2f8] sm:$0xff]
    %v537 = vld [vmem:[#allocation5 + $0x300] sm:$0xff]
    %v538 = vld [vmem:[#allocation5 + $0x308] sm:$0xff]
    %v539 = vld [vmem:[#allocation5 + $0x310] sm:$0xff]
    %v540 = vld [vmem:[#allocation5 + $0x318] sm:$0xff]
    %v541 = vld [vmem:[#allocation5 + $0x320] sm:$0xff]
    %v542 = vld [vmem:[#allocation5 + $0x328] sm:$0xff]
    %v543 = vld [vmem:[#allocation5 + $0x330] sm:$0xff]
    %v544 = vld [vmem:[#allocation5 + $0x338] sm:$0xff]
    %v545 = vld [vmem:[#allocation5 + $0x340] sm:$0xff]
    %v546 = vld [vmem:[#allocation5 + $0x348] sm:$0xff]
    %v547 = vld [vmem:[#allocation5 + $0x350] sm:$0xff]
    %v548 = vld [vmem:[#allocation5 + $0x358] sm:$0xff]
    %v549 = vld [vmem:[#allocation5 + $0x360] sm:$0xff]
    %v550 = vld [vmem:[#allocation5 + $0x368] sm:$0xff]
    %v551 = vld [vmem:[#allocation5 + $0x370] sm:$0xff]
    %v552 = vld [vmem:[#allocation5 + $0x378] sm:$0xff]
    %v553 = vld [vmem:[#allocation5 + $0x380] sm:$0xff]
    %v554 = vld [vmem:[#allocation5 + $0x388] sm:$0xff]
    %v555 = vld [vmem:[#allocation5 + $0x390] sm:$0xff]
    %v556 = vld [vmem:[#allocation5 + $0x398] sm:$0xff]
    %v557 = vld [vmem:[#allocation5 + $0x3a0] sm:$0xff]
    %v558 = vld [vmem:[#allocation5 + $0x3a8] sm:$0xff]
    %v559 = vld [vmem:[#allocation5 + $0x3b0] sm:$0xff]
    %v560 = vld [vmem:[#allocation5 + $0x3b8] sm:$0xff]
    %v561 = vld [vmem:[#allocation5 + $0x3c0] sm:$0xff]
    %v562 = vld [vmem:[#allocation5 + $0x3c8] sm:$0xff]
    %v563 = vld [vmem:[#allocation5 + $0x3d0] sm:$0xff]
    %v564 = vld [vmem:[#allocation5 + $0x3d8] sm:$0xff]
    %v565 = vld [vmem:[#allocation5 + $0x3e0] sm:$0xff]
    %v566 = vld [vmem:[#allocation5 + $0x3e8] sm:$0xff]
    %v567 = vld [vmem:[#allocation5 + $0x3f0] sm:$0xff]
    %v568 = vld [vmem:[#allocation5 + $0x3f8] sm:$0xff]
    %v569 = vld [vmem:[#allocation5 + $0x400] sm:$0xff]
    %v570 = vld [vmem:[#allocation5 + $0x408] sm:$0xff]
    %v571 = vld [vmem:[#allocation5 + $0x410] sm:$0xff]
    %v572 = vld [vmem:[#allocation5 + $0x418] sm:$0xff]
    %v573 = vld [vmem:[#allocation5 + $0x420] sm:$0xff]
    %v574 = vld [vmem:[#allocation5 + $0x428] sm:$0xff]
    %v575 = vld [vmem:[#allocation5 + $0x430] sm:$0xff]
    %v576 = vld [vmem:[#allocation5 + $0x438] sm:$0xff]
    %v577 = vld [vmem:[#allocation5 + $0x440] sm:$0xff]
    %v578 = vld [vmem:[#allocation5 + $0x448] sm:$0xff]
    %v579 = vld [vmem:[#allocation5 + $0x450] sm:$0xff]
    %v580 = vld [vmem:[#allocation5 + $0x458] sm:$0xff]
    %v581 = vld [vmem:[#allocation5 + $0x460] sm:$0xff]
    %v582 = vld [vmem:[#allocation5 + $0x468] sm:$0xff]
    %v583 = vld [vmem:[#allocation5 + $0x470] sm:$0xff]
    %v584 = vld [vmem:[#allocation5 + $0x478] sm:$0xff]
    %v585 = vld [vmem:[#allocation5 + $0x480] sm:$0xff]
    %v586 = vld [vmem:[#allocation5 + $0x488] sm:$0xff]
    %v587 = vld [vmem:[#allocation5 + $0x490] sm:$0xff]
    %v588 = vld [vmem:[#allocation5 + $0x498] sm:$0xff]
    %v589 = vld [vmem:[#allocation5 + $0x4a0] sm:$0xff]
    %v590 = vld [vmem:[#allocation5 + $0x4a8] sm:$0xff]
    %v591 = vld [vmem:[#allocation5 + $0x4b0] sm:$0xff]
    %v592 = vld [vmem:[#allocation5 + $0x4b8] sm:$0xff]
    %v593 = vld [vmem:[#allocation5 + $0x4c0] sm:$0xff]
    %v594 = vld [vmem:[#allocation5 + $0x4c8] sm:$0xff]
    %v595 = vld [vmem:[#allocation5 + $0x4d0] sm:$0xff]
    %v596 = vld [vmem:[#allocation5 + $0x4d8] sm:$0xff]
    %v597 = vld [vmem:[#allocation5 + $0x4e0] sm:$0xff]
    %v598 = vld [vmem:[#allocation5 + $0x4e8] sm:$0xff]
    %v599 = vld [vmem:[#allocation5 + $0x4f0] sm:$0xff]
    %v600 = vld [vmem:[#allocation5 + $0x4f8] sm:$0xff]
    %v601 = vld [vmem:[#allocation5 + $0x500] sm:$0xff]
    %v602 = vld [vmem:[#allocation5 + $0x508] sm:$0xff]
    %v603 = vld [vmem:[#allocation5 + $0x510] sm:$0xff]
    %v604 = vld [vmem:[#allocation5 + $0x518] sm:$0xff]
    %v605 = vld [vmem:[#allocation5 + $0x520] sm:$0xff]
    %v606 = vld [vmem:[#allocation5 + $0x528] sm:$0xff]
    %v607 = vld [vmem:[#allocation5 + $0x530] sm:$0xff]
    %v608 = vld [vmem:[#allocation5 + $0x538] sm:$0xff]
    %v609 = vld [vmem:[#allocation5 + $0x540] sm:$0xff]
    %v610 = vld [vmem:[#allocation5 + $0x548] sm:$0xff]
    %v611 = vld [vmem:[#allocation5 + $0x550] sm:$0xff]
    %v612 = vld [vmem:[#allocation5 + $0x558] sm:$0xff]
    %v613 = vld [vmem:[#allocation5 + $0x560] sm:$0xff]
    %v614 = vld [vmem:[#allocation5 + $0x568] sm:$0xff]
    %v615 = vld [vmem:[#allocation5 + $0x570] sm:$0xff]
    %v616 = vld [vmem:[#allocation5 + $0x578] sm:$0xff]
    %v617 = vld [vmem:[#allocation5 + $0x580] sm:$0xff]
    %v618 = vld [vmem:[#allocation5 + $0x588] sm:$0xff]
    %v619 = vld [vmem:[#allocation5 + $0x590] sm:$0xff]
    %v620 = vld [vmem:[#allocation5 + $0x598] sm:$0xff]
    %v621 = vld [vmem:[#allocation5 + $0x5a0] sm:$0xff]
    %v622 = vld [vmem:[#allocation5 + $0x5a8] sm:$0xff]
    %v623 = vld [vmem:[#allocation5 + $0x5b0] sm:$0xff]
    %v624 = vld [vmem:[#allocation5 + $0x5b8] sm:$0xff]
    %v625 = vld [vmem:[#allocation5 + $0x5c0] sm:$0xff]
    %v626 = vld [vmem:[#allocation5 + $0x5c8] sm:$0xff]
    %v627 = vld [vmem:[#allocation5 + $0x5d0] sm:$0xff]
    %v628 = vld [vmem:[#allocation5 + $0x5d8] sm:$0xff]
    %v629 = vld [vmem:[#allocation5 + $0x5e0] sm:$0xff]
    %v630 = vld [vmem:[#allocation5 + $0x5e8] sm:$0xff]
    %v631 = vld [vmem:[#allocation5 + $0x5f0] sm:$0xff]
    %v632 = vld [vmem:[#allocation5 + $0x5f8] sm:$0xff]
    %633 = vmatprep.subr.mxu0 %v442
    %634 = vmatpush1.msra.mxu0 %v441
    %635 = vmatprep.subr.mxu0 %v444
    %636 = vmatpush1.msra.mxu0 %v443
    %637 = vmatprep.subr.mxu0 %v446
    %638 = vmatpush1.msra.mxu0 %v445
    %639 = vmatprep.subr.mxu0 %v448
    %640 = vmatpush1.msra.mxu0 %v447
    %641 = vmatprep.subr.mxu0 %v450
    %642 = vmatpush1.msra.mxu0 %v449
    %643 = vmatprep.subr.mxu0 %v452
    %644 = vmatpush1.msra.mxu0 %v451
    %645 = vmatprep.subr.mxu0 %v454
    %646 = vmatpush1.msra.mxu0 %v453
    %647 = vmatprep.subr.mxu0 %v456
    %648 = vmatpush1.msra.mxu0 %v455
    %649 = vmatprep.subr.mxu0 %v458
    %650 = vmatpush1.msra.mxu0 %v457
    %651 = vmatprep.subr.mxu0 %v460
    %652 = vmatpush1.msra.mxu0 %v459
    %653 = vmatprep.subr.mxu0 %v462
    %654 = vmatpush1.msra.mxu0 %v461
    %655 = vmatprep.subr.mxu0 %v464
    %656 = vmatpush1.msra.mxu0 %v463
    %657 = vmatprep.subr.mxu0 %v466
    %658 = vmatpush1.msra.mxu0 %v465
    %659 = vmatprep.subr.mxu0 %v468
    %660 = vmatpush1.msra.mxu0 %v467
    %661 = vmatprep.subr.mxu0 %v470
    %662 = vmatpush1.msra.mxu0 %v469
    %663 = vmatprep.subr.mxu0 %v472
    %664 = vmatpush1.msra.mxu0 %v471
    %665 = vmatprep.subr.mxu0 %v474
    %666 = vmatpush1.msra.mxu0 %v473
    %667 = vmatprep.subr.mxu0 %v476
    %668 = vmatpush1.msra.mxu0 %v475
    %669 = vmatprep.subr.mxu0 %v478
    %670 = vmatpush1.msra.mxu0 %v477
    %671 = vmatprep.subr.mxu0 %v480
    %672 = vmatpush1.msra.mxu0 %v479
    %673 = vmatprep.subr.mxu0 %v482
    %674 = vmatpush1.msra.mxu0 %v481
    %675 = vmatprep.subr.mxu0 %v484
    %676 = vmatpush1.msra.mxu0 %v483
    %677 = vmatprep.subr.mxu0 %v486
    %678 = vmatpush1.msra.mxu0 %v485
    %679 = vmatprep.subr.mxu0 %v488
    %680 = vmatpush1.msra.mxu0 %v487
    %681 = vmatprep.subr.mxu0 %v490
    %682 = vmatpush1.msra.mxu0 %v489
    %683 = vmatprep.subr.mxu0 %v492
    %684 = vmatpush1.msra.mxu0 %v491
    %685 = vmatprep.subr.mxu0 %v494
    %686 = vmatpush1.msra.mxu0 %v493
    %687 = vmatprep.subr.mxu0 %v496
    %688 = vmatpush1.msra.mxu0 %v495
    %689 = vmatprep.subr.mxu0 %v498
    %690 = vmatpush1.msra.mxu0 %v497
    %691 = vmatprep.subr.mxu0 %v500
    %692 = vmatpush1.msra.mxu0 %v499
    %693 = vmatprep.subr.mxu0 %v502
    %694 = vmatpush1.msra.mxu0 %v501
    %695 = vmatprep.subr.mxu0 %v504
    %696 = vmatpush1.msra.mxu0 %v503
    %697 = vmatprep.mubr.f32.mxu0 %v279
    %698 = vmatmul.mubr.f32.gmra.mrb[0].mxu0 %v277
    %v699 = vpop.f32.mrb[0].mxu0
    %v700 = vadd.f32 0.0, %v699
    %v701 = vpop.f32.mrb[0].mxu0
    %v702 = vadd.f32 0.0, %v701
    %703 = vmatprep.mubr.f32.mxu0 %v285
    %704 = vmatmul.mubr.f32.gmra.mrb[0].mxu0 %v283
    %v705 = vpop.f32.mrb[0].mxu0
    %v706 = vadd.f32 0.0, %v705
    %v707 = vpop.f32.mrb[0].mxu0
    %v708 = vadd.f32 0.0, %v707
    %709 = vdwg.mxu0
    %710 = vmatprep.subr.mxu0 %v506
    %711 = vmatpush1.msra.mxu0 %v505
    %712 = vmatprep.subr.mxu0 %v508
    %713 = vmatpush1.msra.mxu0 %v507
    %714 = vmatprep.subr.mxu0 %v510
    %715 = vmatpush1.msra.mxu0 %v509
    %716 = vmatprep.subr.mxu0 %v512
    %717 = vmatpush1.msra.mxu0 %v511
    %718 = vmatprep.subr.mxu0 %v514
    %719 = vmatpush1.msra.mxu0 %v513
    %720 = vmatprep.subr.mxu0 %v516
    %721 = vmatpush1.msra.mxu0 %v515
    %722 = vmatprep.subr.mxu0 %v518
    %723 = vmatpush1.msra.mxu0 %v517
    %724 = vmatprep.subr.mxu0 %v520
    %725 = vmatpush1.msra.mxu0 %v519
    %726 = vmatprep.subr.mxu0 %v522
    %727 = vmatpush1.msra.mxu0 %v521
    %728 = vmatprep.subr.mxu0 %v524
    %729 = vmatpush1.msra.mxu0 %v523
    %730 = vmatprep.subr.mxu0 %v526
    %731 = vmatpush1.msra.mxu0 %v525
    %732 = vmatprep.subr.mxu0 %v528
    %733 = vmatpush1.msra.mxu0 %v527
    %734 = vmatprep.subr.mxu0 %v530
    %735 = vmatpush1.msra.mxu0 %v529
    %736 = vmatprep.subr.mxu0 %v532
    %737 = vmatpush1.msra.mxu0 %v531
    %738 = vmatprep.subr.mxu0 %v534
    %739 = vmatpush1.msra.mxu0 %v533
    %740 = vmatprep.subr.mxu0 %v536
    %741 = vmatpush1.msra.mxu0 %v535
    %742 = vmatprep.subr.mxu0 %v538
    %743 = vmatpush1.msra.mxu0 %v537
    %744 = vmatprep.subr.mxu0 %v540
    %745 = vmatpush1.msra.mxu0 %v539
    %746 = vmatprep.subr.mxu0 %v542
    %747 = vmatpush1.msra.mxu0 %v541
    %748 = vmatprep.subr.mxu0 %v544
    %749 = vmatpush1.msra.mxu0 %v543
    %750 = vmatprep.subr.mxu0 %v546
    %751 = vmatpush1.msra.mxu0 %v545
    %752 = vmatprep.subr.mxu0 %v548
    %753 = vmatpush1.msra.mxu0 %v547
    %754 = vmatprep.subr.mxu0 %v550
    %755 = vmatpush1.msra.mxu0 %v549
    %756 = vmatprep.subr.mxu0 %v552
    %757 = vmatpush1.msra.mxu0 %v551
    %758 = vmatprep.subr.mxu0 %v554
    %759 = vmatpush1.msra.mxu0 %v553
    %760 = vmatprep.subr.mxu0 %v556
    %761 = vmatpush1.msra.mxu0 %v555
    %762 = vmatprep.subr.mxu0 %v558
    %763 = vmatpush1.msra.mxu0 %v557
    %764 = vmatprep.subr.mxu0 %v560
    %765 = vmatpush1.msra.mxu0 %v559
    %766 = vmatprep.subr.mxu0 %v562
    %767 = vmatpush1.msra.mxu0 %v561
    %768 = vmatprep.subr.mxu0 %v564
    %769 = vmatpush1.msra.mxu0 %v563
    %770 = vmatprep.subr.mxu0 %v566
    %771 = vmatpush1.msra.mxu0 %v565
    %772 = vmatprep.subr.mxu0 %v568
    %773 = vmatpush1.msra.mxu0 %v567
    %774 = vmatprep.mubr.f32.mxu0 %v356
    %775 = vmatmul.mubr.f32.gmra.mrb[0].mxu0 %v354
    %v776 = vpop.f32.mrb[0].mxu0
    %v777 = vadd.f32 %v700, %v776
    %v778 = vpop.f32.mrb[0].mxu0
    %v779 = vadd.f32 %v702, %v778
    %780 = vmatprep.mubr.f32.mxu0 %v362
    %781 = vmatmul.mubr.f32.gmra.mrb[0].mxu0 %v360
    %v782 = vpop.f32.mrb[0].mxu0
    %v783 = vadd.f32 %v706, %v782
    %v784 = vpop.f32.mrb[0].mxu0
    %v785 = vadd.f32 %v708, %v784
    %786 = vdwg.mxu0
    %787 = vmatprep.subr.mxu0 %v570
    %788 = vmatpush1.msra.mxu0 %v569
    %789 = vmatprep.subr.mxu0 %v572
    %790 = vmatpush1.msra.mxu0 %v571
    %791 = vmatprep.subr.mxu0 %v574
    %792 = vmatpush1.msra.mxu0 %v573
    %793 = vmatprep.subr.mxu0 %v576
    %794 = vmatpush1.msra.mxu0 %v575
    %795 = vmatprep.subr.mxu0 %v578
    %796 = vmatpush1.msra.mxu0 %v577
    %797 = vmatprep.subr.mxu0 %v580
    %798 = vmatpush1.msra.mxu0 %v579
    %799 = vmatprep.subr.mxu0 %v582
    %800 = vmatpush1.msra.mxu0 %v581
    %801 = vmatprep.subr.mxu0 %v584
    %802 = vmatpush1.msra.mxu0 %v583
    %803 = vmatprep.subr.mxu0 %v586
    %804 = vmatpush1.msra.mxu0 %v585
    %805 = vmatprep.subr.mxu0 %v588
    %806 = vmatpush1.msra.mxu0 %v587
    %807 = vmatprep.subr.mxu0 %v590
    %808 = vmatpush1.msra.mxu0 %v589
    %809 = vmatprep.subr.mxu0 %v592
    %810 = vmatpush1.msra.mxu0 %v591
    %811 = vmatprep.subr.mxu0 %v594
    %812 = vmatpush1.msra.mxu0 %v593
    %813 = vmatprep.subr.mxu0 %v596
    %814 = vmatpush1.msra.mxu0 %v595
    %815 = vmatprep.subr.mxu0 %v598
    %816 = vmatpush1.msra.mxu0 %v597
    %817 = vmatprep.subr.mxu0 %v600
    %818 = vmatpush1.msra.mxu0 %v599
    %819 = vmatprep.subr.mxu0 %v602
    %820 = vmatpush1.msra.mxu0 %v601
    %821 = vmatprep.subr.mxu0 %v604
    %822 = vmatpush1.msra.mxu0 %v603
    %823 = vmatprep.subr.mxu0 %v606
    %824 = vmatpush1.msra.mxu0 %v605
    %825 = vmatprep.subr.mxu0 %v608
    %826 = vmatpush1.msra.mxu0 %v607
    %827 = vmatprep.subr.mxu0 %v610
    %828 = vmatpush1.msra.mxu0 %v609
    %829 = vmatprep.subr.mxu0 %v612
    %830 = vmatpush1.msra.mxu0 %v611
    %831 = vmatprep.subr.mxu0 %v614
    %832 = vmatpush1.msra.mxu0 %v613
    %833 = vmatprep.subr.mxu0 %v616
    %834 = vmatpush1.msra.mxu0 %v615
    %835 = vmatprep.subr.mxu0 %v618
    %836 = vmatpush1.msra.mxu0 %v617
    %837 = vmatprep.subr.mxu0 %v620
    %838 = vmatpush1.msra.mxu0 %v619
    %839 = vmatprep.subr.mxu0 %v622
    %840 = vmatpush1.msra.mxu0 %v621
    %841 = vmatprep.subr.mxu0 %v624
    %842 = vmatpush1.msra.mxu0 %v623
    %843 = vmatprep.subr.mxu0 %v626
    %844 = vmatpush1.msra.mxu0 %v625
    %845 = vmatprep.subr.mxu0 %v628
    %846 = vmatpush1.msra.mxu0 %v627
    %847 = vmatprep.subr.mxu0 %v630
    %848 = vmatpush1.msra.mxu0 %v629
    %849 = vmatprep.subr.mxu0 %v632
    %850 = vmatpush1.msra.mxu0 %v631
    %851 = vmatprep.mubr.f32.mxu0 %v433
    %852 = vmatmul.mubr.f32.gmra.mrb[0].mxu0 %v431
    %v853 = vpop.f32.mrb[0].mxu0
    %v854 = vadd.f32 %v777, %v853
    %v855 = vpop.f32.mrb[0].mxu0
    %v856 = vadd.f32 %v779, %v855
    %857 = vmatprep.mubr.f32.mxu0 %v439
    %858 = vmatmul.mubr.f32.gmra.mrb[0].mxu0 %v437
    %v859 = vpop.f32.mrb[0].mxu0
    %v860 = vadd.f32 %v783, %v859
    %v861 = vpop.f32.mrb[0].mxu0
    %v862 = vadd.f32 %v785, %v861
    %863 = vdwg.mxu0
    %864 = vst [vmem:[#allocation8] sm:$0xff] %v854
    %865 = vst [vmem:[#allocation8 + $0x8] sm:$0xff] %v856
    %866 = vst [vmem:[#allocation8 + $0x10] sm:$0xff] %v860
    %867 = vst [vmem:[#allocation8 + $0x18] sm:$0xff] %v862
    %v868 = vld [vmem:[#allocation2] sm:$0xff]
    %v869 = vld [vmem:[#allocation2 + $0x8] sm:$0xff]
    %v870 = vld [vmem:[#allocation2 + $0x10] sm:$0xff]
    %v871 = vld [vmem:[#allocation2 + $0x18] sm:$0xff]
    %v872 = vld [vmem:[#allocation2 + $0x20] sm:$0xff]
    %v873 = vld [vmem:[#allocation2 + $0x28] sm:$0xff]
    %v874 = vld [vmem:[#allocation2 + $0x30] sm:$0xff]
    %v875 = vld [vmem:[#allocation2 + $0x38] sm:$0xff]
    %v876 = vld [vmem:[#allocation2 + $0x40] sm:$0xff]
    %v877 = vld [vmem:[#allocation2 + $0x48] sm:$0xff]
    %v878 = vld [vmem:[#allocation2 + $0x50] sm:$0xff]
    %v879 = vld [vmem:[#allocation2 + $0x58] sm:$0xff]
    %v880 = vld [vmem:[#allocation2 + $0x60] sm:$0xff]
    %v881 = vld [vmem:[#allocation2 + $0x68] sm:$0xff]
    %v882 = vld [vmem:[#allocation2 + $0x70] sm:$0xff]
    %v883 = vld [vmem:[#allocation2 + $0x78] sm:$0xff]
    %v884 = vld [vmem:[#allocation2 + $0x80] sm:$0xff]
    %v885 = vld [vmem:[#allocation2 + $0x88] sm:$0xff]
    %v886 = vld [vmem:[#allocation2 + $0x90] sm:$0xff]
    %v887 = vld [vmem:[#allocation2 + $0x98] sm:$0xff]
    %v888 = vld [vmem:[#allocation2 + $0xa0] sm:$0xff]
    %v889 = vld [vmem:[#allocation2 + $0xa8] sm:$0xff]
    %v890 = vld [vmem:[#allocation2 + $0xb0] sm:$0xff]
    %v891 = vld [vmem:[#allocation2 + $0xb8] sm:$0xff]
    %v892 = vld [vmem:[#allocation2 + $0xc0] sm:$0xff]
    %v893 = vld [vmem:[#allocation2 + $0xc8] sm:$0xff]
    %v894 = vld [vmem:[#allocation2 + $0xd0] sm:$0xff]
    %v895 = vld [vmem:[#allocation2 + $0xd8] sm:$0xff]
    %v896 = vld [vmem:[#allocation2 + $0xe0] sm:$0xff]
    %v897 = vld [vmem:[#allocation2 + $0xe8] sm:$0xff]
    %v898 = vld [vmem:[#allocation2 + $0xf0] sm:$0xff]
    %v899 = vld [vmem:[#allocation2 + $0xf8] sm:$0xff]
    %v900 = vld [vmem:[#allocation2 + $0x100] sm:$0xff]
    %v901 = vld [vmem:[#allocation2 + $0x108] sm:$0xff]
    %v902 = vld [vmem:[#allocation2 + $0x110] sm:$0xff]
    %v903 = vld [vmem:[#allocation2 + $0x118] sm:$0xff]
    %v904 = vld [vmem:[#allocation2 + $0x120] sm:$0xff]
    %v905 = vld [vmem:[#allocation2 + $0x128] sm:$0xff]
    %v906 = vld [vmem:[#allocation2 + $0x130] sm:$0xff]
    %v907 = vld [vmem:[#allocation2 + $0x138] sm:$0xff]
    %v908 = vld [vmem:[#allocation2 + $0x140] sm:$0xff]
    %v909 = vld [vmem:[#allocation2 + $0x148] sm:$0xff]
    %v910 = vld [vmem:[#allocation2 + $0x150] sm:$0xff]
    %v911 = vld [vmem:[#allocation2 + $0x158] sm:$0xff]
    %v912 = vld [vmem:[#allocation2 + $0x160] sm:$0xff]
    %v913 = vld [vmem:[#allocation2 + $0x168] sm:$0xff]
    %v914 = vld [vmem:[#allocation2 + $0x170] sm:$0xff]
    %v915 = vld [vmem:[#allocation2 + $0x178] sm:$0xff]
    %v916 = vld [vmem:[#allocation2 + $0x180] sm:$0xff]
    %v917 = vld [vmem:[#allocation2 + $0x188] sm:$0xff]
    %v918 = vld [vmem:[#allocation2 + $0x190] sm:$0xff]
    %v919 = vld [vmem:[#allocation2 + $0x198] sm:$0xff]
    %v920 = vld [vmem:[#allocation2 + $0x1a0] sm:$0xff]
    %v921 = vld [vmem:[#allocation2 + $0x1a8] sm:$0xff]
    %v922 = vld [vmem:[#allocation2 + $0x1b0] sm:$0xff]
    %v923 = vld [vmem:[#allocation2 + $0x1b8] sm:$0xff]
    %v924 = vld [vmem:[#allocation2 + $0x1c0] sm:$0xff]
    %v925 = vld [vmem:[#allocation2 + $0x1c8] sm:$0xff]
    %v926 = vld [vmem:[#allocation2 + $0x1d0] sm:$0xff]
    %v927 = vld [vmem:[#allocation2 + $0x1d8] sm:$0xff]
    %v928 = vld [vmem:[#allocation2 + $0x1e0] sm:$0xff]
    %v929 = vld [vmem:[#allocation2 + $0x1e8] sm:$0xff]
    %v930 = vld [vmem:[#allocation2 + $0x1f0] sm:$0xff]
    %v931 = vld [vmem:[#allocation2 + $0x1f8] sm:$0xff]
    %v932 = vld [vmem:[#allocation2 + $0x200] sm:$0xff]
    %v933 = vld [vmem:[#allocation2 + $0x208] sm:$0xff]
    %v934 = vld [vmem:[#allocation2 + $0x210] sm:$0xff]
    %v935 = vld [vmem:[#allocation2 + $0x218] sm:$0xff]
    %v936 = vld [vmem:[#allocation2 + $0x220] sm:$0xff]
    %v937 = vld [vmem:[#allocation2 + $0x228] sm:$0xff]
    %v938 = vld [vmem:[#allocation2 + $0x230] sm:$0xff]
    %v939 = vld [vmem:[#allocation2 + $0x238] sm:$0xff]
    %v940 = vld [vmem:[#allocation2 + $0x240] sm:$0xff]
    %v941 = vld [vmem:[#allocation2 + $0x248] sm:$0xff]
    %v942 = vld [vmem:[#allocation2 + $0x250] sm:$0xff]
    %v943 = vld [vmem:[#allocation2 + $0x258] sm:$0xff]
    %v944 = vld [vmem:[#allocation2 + $0x260] sm:$0xff]
    %v945 = vld [vmem:[#allocation2 + $0x268] sm:$0xff]
    %v946 = vld [vmem:[#allocation2 + $0x270] sm:$0xff]
    %v947 = vld [vmem:[#allocation2 + $0x278] sm:$0xff]
    %v948 = vld [vmem:[#allocation2 + $0x280] sm:$0xff]
    %v949 = vld [vmem:[#allocation2 + $0x288] sm:$0xff]
    %v950 = vld [vmem:[#allocation2 + $0x290] sm:$0xff]
    %v951 = vld [vmem:[#allocation2 + $0x298] sm:$0xff]
    %v952 = vld [vmem:[#allocation2 + $0x2a0] sm:$0xff]
    %v953 = vld [vmem:[#allocation2 + $0x2a8] sm:$0xff]
    %v954 = vld [vmem:[#allocation2 + $0x2b0] sm:$0xff]
    %v955 = vld [vmem:[#allocation2 + $0x2b8] sm:$0xff]
    %v956 = vld [vmem:[#allocation2 + $0x2c0] sm:$0xff]
    %v957 = vld [vmem:[#allocation2 + $0x2c8] sm:$0xff]
    %v958 = vld [vmem:[#allocation2 + $0x2d0] sm:$0xff]
    %v959 = vld [vmem:[#allocation2 + $0x2d8] sm:$0xff]
    %v960 = vld [vmem:[#allocation2 + $0x2e0] sm:$0xff]
    %v961 = vld [vmem:[#allocation2 + $0x2e8] sm:$0xff]
    %v962 = vld [vmem:[#allocation2 + $0x2f0] sm:$0xff]
    %v963 = vld [vmem:[#allocation2 + $0x2f8] sm:$0xff]
    %v964 = vld [vmem:[#allocation7] sm:$0xff]
    %v965 = vld [vmem:[#allocation7 + $0x8] sm:$0xff]
    %v966 = vld [vmem:[#allocation7 + $0x10] sm:$0xff]
    %v967 = vld [vmem:[#allocation7 + $0x18] sm:$0xff]
    %v968 = vld [vmem:[#allocation7 + $0x20] sm:$0xff]
    %v969 = vld [vmem:[#allocation7 + $0x28] sm:$0xff]
    %v970 = vld [vmem:[#allocation7 + $0x30] sm:$0xff]
    %v971 = vld [vmem:[#allocation7 + $0x38] sm:$0xff]
    %v972 = vld [vmem:[#allocation7 + $0x40] sm:$0xff]
    %v973 = vld [vmem:[#allocation7 + $0x48] sm:$0xff]
    %v974 = vld [vmem:[#allocation7 + $0x50] sm:$0xff]
    %v975 = vld [vmem:[#allocation7 + $0x58] sm:$0xff]
    %v976 = vld [vmem:[#allocation7 + $0x60] sm:$0xff]
    %v977 = vld [vmem:[#allocation7 + $0x68] sm:$0xff]
    %v978 = vld [vmem:[#allocation7 + $0x70] sm:$0xff]
    %v979 = vld [vmem:[#allocation7 + $0x78] sm:$0xff]
    %v980 = vld [vmem:[#allocation7 + $0x80] sm:$0xff]
    %v981 = vld [vmem:[#allocation7 + $0x88] sm:$0xff]
    %v982 = vld [vmem:[#allocation7 + $0x90] sm:$0xff]
    %v983 = vld [vmem:[#allocation7 + $0x98] sm:$0xff]
    %v984 = vld [vmem:[#allocation7 + $0xa0] sm:$0xff]
    %v985 = vld [vmem:[#allocation7 + $0xa8] sm:$0xff]
    %v986 = vld [vmem:[#allocation7 + $0xb0] sm:$0xff]
    %v987 = vld [vmem:[#allocation7 + $0xb8] sm:$0xff]
    %v988 = vld [vmem:[#allocation7 + $0xc0] sm:$0xff]
    %v989 = vld [vmem:[#allocation7 + $0xc8] sm:$0xff]
    %v990 = vld [vmem:[#allocation7 + $0xd0] sm:$0xff]
    %v991 = vld [vmem:[#allocation7 + $0xd8] sm:$0xff]
    %v992 = vld [vmem:[#allocation7 + $0xe0] sm:$0xff]
    %v993 = vld [vmem:[#allocation7 + $0xe8] sm:$0xff]
    %v994 = vld [vmem:[#allocation7 + $0xf0] sm:$0xff]
    %v995 = vld [vmem:[#allocation7 + $0xf8] sm:$0xff]
    %v996 = vld [vmem:[#allocation7 + $0x100] sm:$0xff]
    %v997 = vld [vmem:[#allocation7 + $0x108] sm:$0xff]
    %v998 = vld [vmem:[#allocation7 + $0x110] sm:$0xff]
    %v999 = vld [vmem:[#allocation7 + $0x118] sm:$0xff]
    %v1000 = vld [vmem:[#allocation7 + $0x120] sm:$0xff]
    %v1001 = vld [vmem:[#allocation7 + $0x128] sm:$0xff]
    %v1002 = vld [vmem:[#allocation7 + $0x130] sm:$0xff]
    %v1003 = vld [vmem:[#allocation7 + $0x138] sm:$0xff]
    %v1004 = vld [vmem:[#allocation7 + $0x140] sm:$0xff]
    %v1005 = vld [vmem:[#allocation7 + $0x148] sm:$0xff]
    %v1006 = vld [vmem:[#allocation7 + $0x150] sm:$0xff]
    %v1007 = vld [vmem:[#allocation7 + $0x158] sm:$0xff]
    %v1008 = vld [vmem:[#allocation7 + $0x160] sm:$0xff]
    %v1009 = vld [vmem:[#allocation7 + $0x168] sm:$0xff]
    %v1010 = vld [vmem:[#allocation7 + $0x170] sm:$0xff]
    %v1011 = vld [vmem:[#allocation7 + $0x178] sm:$0xff]
    %v1012 = vld [vmem:[#allocation7 + $0x180] sm:$0xff]
    %v1013 = vld [vmem:[#allocation7 + $0x188] sm:$0xff]
    %v1014 = vld [vmem:[#allocation7 + $0x190] sm:$0xff]
    %v1015 = vld [vmem:[#allocation7 + $0x198] sm:$0xff]
    %v1016 = vld [vmem:[#allocation7 + $0x1a0] sm:$0xff]
    %v1017 = vld [vmem:[#allocation7 + $0x1a8] sm:$0xff]
    %v1018 = vld [vmem:[#allocation7 + $0x1b0] sm:$0xff]
    %v1019 = vld [vmem:[#allocation7 + $0x1b8] sm:$0xff]
    %v1020 = vld [vmem:[#allocation7 + $0x1c0] sm:$0xff]
    %v1021 = vld [vmem:[#allocation7 + $0x1c8] sm:$0xff]
    %v1022 = vld [vmem:[#allocation7 + $0x1d0] sm:$0xff]
    %v1023 = vld [vmem:[#allocation7 + $0x1d8] sm:$0xff]
    %v1024 = vld [vmem:[#allocation7 + $0x1e0] sm:$0xff]
    %v1025 = vld [vmem:[#allocation7 + $0x1e8] sm:$0xff]
    %v1026 = vld [vmem:[#allocation7 + $0x1f0] sm:$0xff]
    %v1027 = vld [vmem:[#allocation7 + $0x1f8] sm:$0xff]
    %v1028 = vld [vmem:[#allocation7 + $0x200] sm:$0xff]
    %v1029 = vld [vmem:[#allocation7 + $0x208] sm:$0xff]
    %v1030 = vld [vmem:[#allocation7 + $0x210] sm:$0xff]
    %v1031 = vld [vmem:[#allocation7 + $0x218] sm:$0xff]
    %v1032 = vld [vmem:[#allocation7 + $0x220] sm:$0xff]
    %v1033 = vld [vmem:[#allocation7 + $0x228] sm:$0xff]
    %v1034 = vld [vmem:[#allocation7 + $0x230] sm:$0xff]
    %v1035 = vld [vmem:[#allocation7 + $0x238] sm:$0xff]
    %v1036 = vld [vmem:[#allocation7 + $0x240] sm:$0xff]
    %v1037 = vld [vmem:[#allocation7 + $0x248] sm:$0xff]
    %v1038 = vld [vmem:[#allocation7 + $0x250] sm:$0xff]
    %v1039 = vld [vmem:[#allocation7 + $0x258] sm:$0xff]
    %v1040 = vld [vmem:[#allocation7 + $0x260] sm:$0xff]
    %v1041 = vld [vmem:[#allocation7 + $0x268] sm:$0xff]
    %v1042 = vld [vmem:[#allocation7 + $0x270] sm:$0xff]
    %v1043 = vld [vmem:[#allocation7 + $0x278] sm:$0xff]
    %v1044 = vld [vmem:[#allocation7 + $0x280] sm:$0xff]
    %v1045 = vld [vmem:[#allocation7 + $0x288] sm:$0xff]
    %v1046 = vld [vmem:[#allocation7 + $0x290] sm:$0xff]
    %v1047 = vld [vmem:[#allocation7 + $0x298] sm:$0xff]
    %v1048 = vld [vmem:[#allocation7 + $0x2a0] sm:$0xff]
    %v1049 = vld [vmem:[#allocation7 + $0x2a8] sm:$0xff]
    %v1050 = vld [vmem:[#allocation7 + $0x2b0] sm:$0xff]
    %v1051 = vld [vmem:[#allocation7 + $0x2b8] sm:$0xff]
    %v1052 = vld [vmem:[#allocation7 + $0x2c0] sm:$0xff]
    %v1053 = vld [vmem:[#allocation7 + $0x2c8] sm:$0xff]
    %v1054 = vld [vmem:[#allocation7 + $0x2d0] sm:$0xff]
    %v1055 = vld [vmem:[#allocation7 + $0x2d8] sm:$0xff]
    %v1056 = vld [vmem:[#allocation7 + $0x2e0] sm:$0xff]
    %v1057 = vld [vmem:[#allocation7 + $0x2e8] sm:$0xff]
    %v1058 = vld [vmem:[#allocation7 + $0x2f0] sm:$0xff]
    %v1059 = vld [vmem:[#allocation7 + $0x2f8] sm:$0xff]
    %1060 = vmatprep.subr.mxu0 0.0
    %1061 = vmatpush1.msra.mxu0 %v964
    %1062 = vmatprep.subr.mxu0 0.0
    %1063 = vmatpush1.msra.mxu0 %v965
    %1064 = vmatprep.subr.mxu0 0.0
    %1065 = vmatpush1.msra.mxu0 %v966
    %1066 = vmatprep.subr.mxu0 0.0
    %1067 = vmatpush1.msra.mxu0 %v967
    %1068 = vmatprep.subr.mxu0 0.0
    %1069 = vmatpush1.msra.mxu0 %v968
    %1070 = vmatprep.subr.mxu0 0.0
    %1071 = vmatpush1.msra.mxu0 %v969
    %1072 = vmatprep.subr.mxu0 0.0
    %1073 = vmatpush1.msra.mxu0 %v970
    %1074 = vmatprep.subr.mxu0 0.0
    %1075 = vmatpush1.msra.mxu0 %v971
    %1076 = vmatprep.subr.mxu0 0.0
    %1077 = vmatpush1.msra.mxu0 %v972
    %1078 = vmatprep.subr.mxu0 0.0
    %1079 = vmatpush1.msra.mxu0 %v973
    %1080 = vmatprep.subr.mxu0 0.0
    %1081 = vmatpush1.msra.mxu0 %v974
    %1082 = vmatprep.subr.mxu0 0.0
    %1083 = vmatpush1.msra.mxu0 %v975
    %1084 = vmatprep.subr.mxu0 0.0
    %1085 = vmatpush1.msra.mxu0 %v976
    %1086 = vmatprep.subr.mxu0 0.0
    %1087 = vmatpush1.msra.mxu0 %v977
    %1088 = vmatprep.subr.mxu0 0.0
    %1089 = vmatpush1.msra.mxu0 %v978
    %1090 = vmatprep.subr.mxu0 0.0
    %1091 = vmatpush1.msra.mxu0 %v979
    %1092 = vmatprep.subr.mxu0 0.0
    %1093 = vmatpush1.msra.mxu0 %v980
    %1094 = vmatprep.subr.mxu0 0.0
    %1095 = vmatpush1.msra.mxu0 %v981
    %1096 = vmatprep.subr.mxu0 0.0
    %1097 = vmatpush1.msra.mxu0 %v982
    %1098 = vmatprep.subr.mxu0 0.0
    %1099 = vmatpush1.msra.mxu0 %v983
    %1100 = vmatprep.subr.mxu0 0.0
    %1101 = vmatpush1.msra.mxu0 %v984
    %1102 = vmatprep.subr.mxu0 0.0
    %1103 = vmatpush1.msra.mxu0 %v985
    %1104 = vmatprep.subr.mxu0 0.0
    %1105 = vmatpush1.msra.mxu0 %v986
    %1106 = vmatprep.subr.mxu0 0.0
    %1107 = vmatpush1.msra.mxu0 %v987
    %1108 = vmatprep.subr.mxu0 0.0
    %1109 = vmatpush1.msra.mxu0 %v988
    %1110 = vmatprep.subr.mxu0 0.0
    %1111 = vmatpush1.msra.mxu0 %v989
    %1112 = vmatprep.subr.mxu0 0.0
    %1113 = vmatpush1.msra.mxu0 %v990
    %1114 = vmatprep.subr.mxu0 0.0
    %1115 = vmatpush1.msra.mxu0 %v991
    %1116 = vmatprep.subr.mxu0 0.0
    %1117 = vmatpush1.msra.mxu0 %v992
    %1118 = vmatprep.subr.mxu0 0.0
    %1119 = vmatpush1.msra.mxu0 %v993
    %1120 = vmatprep.subr.mxu0 0.0
    %1121 = vmatpush1.msra.mxu0 %v994
    %1122 = vmatprep.subr.mxu0 0.0
    %1123 = vmatpush1.msra.mxu0 %v995
    %1124 = vmatprep.mubr.f32.mxu0 %v869
    %1125 = vmatmul.mubr.f32.gmra.mrb[0].mxu0 %v868
    %v1126 = vpop.f32.mrb[0].mxu0
    %v1127 = vadd.f32 0.0, %v1126
    %v1128 = vpop.f32.mrb[0].mxu0
    %1129 = vmatprep.mubr.f32.mxu0 %v875
    %1130 = vmatmul.mubr.f32.gmra.mrb[0].mxu0 %v874
    %v1131 = vpop.f32.mrb[0].mxu0
    %v1132 = vadd.f32 0.0, %v1131
    %v1133 = vpop.f32.mrb[0].mxu0
    %1134 = vmatprep.mubr.f32.mxu0 %v881
    %1135 = vmatmul.mubr.f32.gmra.mrb[0].mxu0 %v880
    %v1136 = vpop.f32.mrb[0].mxu0
    %v1137 = vadd.f32 0.0, %v1136
    %v1138 = vpop.f32.mrb[0].mxu0
    %1139 = vmatprep.mubr.f32.mxu0 %v887
    %1140 = vmatmul.mubr.f32.gmra.mrb[0].mxu0 %v886
    %v1141 = vpop.f32.mrb[0].mxu0
    %v1142 = vadd.f32 0.0, %v1141
    %v1143 = vpop.f32.mrb[0].mxu0
    %1144 = vmatprep.mubr.f32.mxu0 %v893
    %1145 = vmatmul.mubr.f32.gmra.mrb[0].mxu0 %v892
    %v1146 = vpop.f32.mrb[0].mxu0
    %v1147 = vadd.f32 0.0, %v1146
    %v1148 = vpop.f32.mrb[0].mxu0
    %1149 = vmatprep.mubr.f32.mxu0 %v899
    %1150 = vmatmul.mubr.f32.gmra.mrb[0].mxu0 %v898
    %v1151 = vpop.f32.mrb[0].mxu0
    %v1152 = vadd.f32 0.0, %v1151
    %v1153 = vpop.f32.mrb[0].mxu0
    %1154 = vmatprep.mubr.f32.mxu0 %v905
    %1155 = vmatmul.mubr.f32.gmra.mrb[0].mxu0 %v904
    %v1156 = vpop.f32.mrb[0].mxu0
    %v1157 = vadd.f32 0.0, %v1156
    %v1158 = vpop.f32.mrb[0].mxu0
    %1159 = vmatprep.mubr.f32.mxu0 %v911
    %1160 = vmatmul.mubr.f32.gmra.mrb[0].mxu0 %v910
    %v1161 = vpop.f32.mrb[0].mxu0
    %v1162 = vadd.f32 0.0, %v1161
    %v1163 = vpop.f32.mrb[0].mxu0
    %1164 = vmatprep.mubr.f32.mxu0 %v917
    %1165 = vmatmul.mubr.f32.gmra.mrb[0].mxu0 %v916
    %v1166 = vpop.f32.mrb[0].mxu0
    %v1167 = vadd.f32 0.0, %v1166
    %v1168 = vpop.f32.mrb[0].mxu0
    %1169 = vmatprep.mubr.f32.mxu0 %v923
    %1170 = vmatmul.mubr.f32.gmra.mrb[0].mxu0 %v922
    %v1171 = vpop.f32.mrb[0].mxu0
    %v1172 = vadd.f32 0.0, %v1171
    %v1173 = vpop.f32.mrb[0].mxu0
    %1174 = vmatprep.mubr.f32.mxu0 %v929
    %1175 = vmatmul.mubr.f32.gmra.mrb[0].mxu0 %v928
    %v1176 = vpop.f32.mrb[0].mxu0
    %v1177 = vadd.f32 0.0, %v1176
    %v1178 = vpop.f32.mrb[0].mxu0
    %1179 = vmatprep.mubr.f32.mxu0 %v935
    %1180 = vmatmul.mubr.f32.gmra.mrb[0].mxu0 %v934
    %v1181 = vpop.f32.mrb[0].mxu0
    %v1182 = vadd.f32 0.0, %v1181
    %v1183 = vpop.f32.mrb[0].mxu0
    %1184 = vmatprep.mubr.f32.mxu0 %v941
    %1185 = vmatmul.mubr.f32.gmra.mrb[0].mxu0 %v940
    %v1186 = vpop.f32.mrb[0].mxu0
    %v1187 = vadd.f32 0.0, %v1186
    %v1188 = vpop.f32.mrb[0].mxu0
    %1189 = vmatprep.mubr.f32.mxu0 %v947
    %1190 = vmatmul.mubr.f32.gmra.mrb[0].mxu0 %v946
    %v1191 = vpop.f32.mrb[0].mxu0
    %v1192 = vadd.f32 0.0, %v1191
    %v1193 = vpop.f32.mrb[0].mxu0
    %1194 = vmatprep.mubr.f32.mxu0 %v953
    %1195 = vmatmul.mubr.f32.gmra.mrb[0].mxu0 %v952
    %v1196 = vpop.f32.mrb[0].mxu0
    %v1197 = vadd.f32 0.0, %v1196
    %v1198 = vpop.f32.mrb[0].mxu0
    %1199 = vmatprep.mubr.f32.mxu0 %v959
    %1200 = vmatmul.mubr.f32.gmra.mrb[0].mxu0 %v958
    %v1201 = vpop.f32.mrb[0].mxu0
    %v1202 = vadd.f32 0.0, %v1201
    %v1203 = vpop.f32.mrb[0].mxu0
    %1204 = vdwg.mxu0
    %1205 = vmatprep.subr.mxu0 0.0
    %1206 = vmatpush1.msra.mxu0 %v996
    %1207 = vmatprep.subr.mxu0 0.0
    %1208 = vmatpush1.msra.mxu0 %v997
    %1209 = vmatprep.subr.mxu0 0.0
    %1210 = vmatpush1.msra.mxu0 %v998
    %1211 = vmatprep.subr.mxu0 0.0
    %1212 = vmatpush1.msra.mxu0 %v999
    %1213 = vmatprep.subr.mxu0 0.0
    %1214 = vmatpush1.msra.mxu0 %v1000
    %1215 = vmatprep.subr.mxu0 0.0
    %1216 = vmatpush1.msra.mxu0 %v1001
    %1217 = vmatprep.subr.mxu0 0.0
    %1218 = vmatpush1.msra.mxu0 %v1002
    %1219 = vmatprep.subr.mxu0 0.0
    %1220 = vmatpush1.msra.mxu0 %v1003
    %1221 = vmatprep.subr.mxu0 0.0
    %1222 = vmatpush1.msra.mxu0 %v1004
    %1223 = vmatprep.subr.mxu0 0.0
    %1224 = vmatpush1.msra.mxu0 %v1005
    %1225 = vmatprep.subr.mxu0 0.0
    %1226 = vmatpush1.msra.mxu0 %v1006
    %1227 = vmatprep.subr.mxu0 0.0
    %1228 = vmatpush1.msra.mxu0 %v1007
    %1229 = vmatprep.subr.mxu0 0.0
    %1230 = vmatpush1.msra.mxu0 %v1008
    %1231 = vmatprep.subr.mxu0 0.0
    %1232 = vmatpush1.msra.mxu0 %v1009
    %1233 = vmatprep.subr.mxu0 0.0
    %1234 = vmatpush1.msra.mxu0 %v1010
    %1235 = vmatprep.subr.mxu0 0.0
    %1236 = vmatpush1.msra.mxu0 %v1011
    %1237 = vmatprep.subr.mxu0 0.0
    %1238 = vmatpush1.msra.mxu0 %v1012
    %1239 = vmatprep.subr.mxu0 0.0
    %1240 = vmatpush1.msra.mxu0 %v1013
    %1241 = vmatprep.subr.mxu0 0.0
    %1242 = vmatpush1.msra.mxu0 %v1014
    %1243 = vmatprep.subr.mxu0 0.0
    %1244 = vmatpush1.msra.mxu0 %v1015
    %1245 = vmatprep.subr.mxu0 0.0
    %1246 = vmatpush1.msra.mxu0 %v1016
    %1247 = vmatprep.subr.mxu0 0.0
    %1248 = vmatpush1.msra.mxu0 %v1017
    %1249 = vmatprep.subr.mxu0 0.0
    %1250 = vmatpush1.msra.mxu0 %v1018
    %1251 = vmatprep.subr.mxu0 0.0
    %1252 = vmatpush1.msra.mxu0 %v1019
    %1253 = vmatprep.subr.mxu0 0.0
    %1254 = vmatpush1.msra.mxu0 %v1020
    %1255 = vmatprep.subr.mxu0 0.0
    %1256 = vmatpush1.msra.mxu0 %v1021
    %1257 = vmatprep.subr.mxu0 0.0
    %1258 = vmatpush1.msra.mxu0 %v1022
    %1259 = vmatprep.subr.mxu0 0.0
    %1260 = vmatpush1.msra.mxu0 %v1023
    %1261 = vmatprep.subr.mxu0 0.0
    %1262 = vmatpush1.msra.mxu0 %v1024
    %1263 = vmatprep.subr.mxu0 0.0
    %1264 = vmatpush1.msra.mxu0 %v1025
    %1265 = vmatprep.subr.mxu0 0.0
    %1266 = vmatpush1.msra.mxu0 %v1026
    %1267 = vmatprep.subr.mxu0 0.0
    %1268 = vmatpush1.msra.mxu0 %v1027
    %1269 = vmatprep.mubr.f32.mxu0 %v871
    %1270 = vmatmul.mubr.f32.gmra.mrb[0].mxu0 %v870
    %v1271 = vpop.f32.mrb[0].mxu0
    %v1272 = vadd.f32 %v1127, %v1271
    %v1273 = vpop.f32.mrb[0].mxu0
    %1274 = vmatprep.mubr.f32.mxu0 %v877
    %1275 = vmatmul.mubr.f32.gmra.mrb[0].mxu0 %v876
    %v1276 = vpop.f32.mrb[0].mxu0
    %v1277 = vadd.f32 %v1132, %v1276
    %v1278 = vpop.f32.mrb[0].mxu0
    %1279 = vmatprep.mubr.f32.mxu0 %v883
    %1280 = vmatmul.mubr.f32.gmra.mrb[0].mxu0 %v882
    %v1281 = vpop.f32.mrb[0].mxu0
    %v1282 = vadd.f32 %v1137, %v1281
    %v1283 = vpop.f32.mrb[0].mxu0
    %1284 = vmatprep.mubr.f32.mxu0 %v889
    %1285 = vmatmul.mubr.f32.gmra.mrb[0].mxu0 %v888
    %v1286 = vpop.f32.mrb[0].mxu0
    %v1287 = vadd.f32 %v1142, %v1286
    %v1288 = vpop.f32.mrb[0].mxu0
    %1289 = vmatprep.mubr.f32.mxu0 %v895
    %1290 = vmatmul.mubr.f32.gmra.mrb[0].mxu0 %v894
    %v1291 = vpop.f32.mrb[0].mxu0
    %v1292 = vadd.f32 %v1147, %v1291
    %v1293 = vpop.f32.mrb[0].mxu0
    %1294 = vmatprep.mubr.f32.mxu0 %v901
    %1295 = vmatmul.mubr.f32.gmra.mrb[0].mxu0 %v900
    %v1296 = vpop.f32.mrb[0].mxu0
    %v1297 = vadd.f32 %v1152, %v1296
    %v1298 = vpop.f32.mrb[0].mxu0
    %1299 = vmatprep.mubr.f32.mxu0 %v907
    %1300 = vmatmul.mubr.f32.gmra.mrb[0].mxu0 %v906
    %v1301 = vpop.f32.mrb[0].mxu0
    %v1302 = vadd.f32 %v1157, %v1301
    %v1303 = vpop.f32.mrb[0].mxu0
    %1304 = vmatprep.mubr.f32.mxu0 %v913
    %1305 = vmatmul.mubr.f32.gmra.mrb[0].mxu0 %v912
    %v1306 = vpop.f32.mrb[0].mxu0
    %v1307 = vadd.f32 %v1162, %v1306
    %v1308 = vpop.f32.mrb[0].mxu0
    %1309 = vmatprep.mubr.f32.mxu0 %v919
    %1310 = vmatmul.mubr.f32.gmra.mrb[0].mxu0 %v918
    %v1311 = vpop.f32.mrb[0].mxu0
    %v1312 = vadd.f32 %v1167, %v1311
    %v1313 = vpop.f32.mrb[0].mxu0
    %1314 = vmatprep.mubr.f32.mxu0 %v925
    %1315 = vmatmul.mubr.f32.gmra.mrb[0].mxu0 %v924
    %v1316 = vpop.f32.mrb[0].mxu0
    %v1317 = vadd.f32 %v1172, %v1316
    %v1318 = vpop.f32.mrb[0].mxu0
    %1319 = vmatprep.mubr.f32.mxu0 %v931
    %1320 = vmatmul.mubr.f32.gmra.mrb[0].mxu0 %v930
    %v1321 = vpop.f32.mrb[0].mxu0
    %v1322 = vadd.f32 %v1177, %v1321
    %v1323 = vpop.f32.mrb[0].mxu0
    %1324 = vmatprep.mubr.f32.mxu0 %v937
    %1325 = vmatmul.mubr.f32.gmra.mrb[0].mxu0 %v936
    %v1326 = vpop.f32.mrb[0].mxu0
    %v1327 = vadd.f32 %v1182, %v1326
    %v1328 = vpop.f32.mrb[0].mxu0
    %1329 = vmatprep.mubr.f32.mxu0 %v943
    %1330 = vmatmul.mubr.f32.gmra.mrb[0].mxu0 %v942
    %v1331 = vpop.f32.mrb[0].mxu0
    %v1332 = vadd.f32 %v1187, %v1331
    %v1333 = vpop.f32.mrb[0].mxu0
    %1334 = vmatprep.mubr.f32.mxu0 %v949
    %1335 = vmatmul.mubr.f32.gmra.mrb[0].mxu0 %v948
    %v1336 = vpop.f32.mrb[0].mxu0
    %v1337 = vadd.f32 %v1192, %v1336
    %v1338 = vpop.f32.mrb[0].mxu0
    %1339 = vmatprep.mubr.f32.mxu0 %v955
    %1340 = vmatmul.mubr.f32.gmra.mrb[0].mxu0 %v954
    %v1341 = vpop.f32.mrb[0].mxu0
    %v1342 = vadd.f32 %v1197, %v1341
    %v1343 = vpop.f32.mrb[0].mxu0
    %1344 = vmatprep.mubr.f32.mxu0 %v961
    %1345 = vmatmul.mubr.f32.gmra.mrb[0].mxu0 %v960
    %v1346 = vpop.f32.mrb[0].mxu0
    %v1347 = vadd.f32 %v1202, %v1346
    %v1348 = vpop.f32.mrb[0].mxu0
    %1349 = vdwg.mxu0
    %1350 = vmatprep.subr.mxu0 0.0
    %1351 = vmatpush1.msra.mxu0 %v1028
    %1352 = vmatprep.subr.mxu0 0.0
    %1353 = vmatpush1.msra.mxu0 %v1029
    %1354 = vmatprep.subr.mxu0 0.0
    %1355 = vmatpush1.msra.mxu0 %v1030
    %1356 = vmatprep.subr.mxu0 0.0
    %1357 = vmatpush1.msra.mxu0 %v1031
    %1358 = vmatprep.subr.mxu0 0.0
    %1359 = vmatpush1.msra.mxu0 %v1032
    %1360 = vmatprep.subr.mxu0 0.0
    %1361 = vmatpush1.msra.mxu0 %v1033
    %1362 = vmatprep.subr.mxu0 0.0
    %1363 = vmatpush1.msra.mxu0 %v1034
    %1364 = vmatprep.subr.mxu0 0.0
    %1365 = vmatpush1.msra.mxu0 %v1035
    %1366 = vmatprep.subr.mxu0 0.0
    %1367 = vmatpush1.msra.mxu0 %v1036
    %1368 = vmatprep.subr.mxu0 0.0
    %1369 = vmatpush1.msra.mxu0 %v1037
    %1370 = vmatprep.subr.mxu0 0.0
    %1371 = vmatpush1.msra.mxu0 %v1038
    %1372 = vmatprep.subr.mxu0 0.0
    %1373 = vmatpush1.msra.mxu0 %v1039
    %1374 = vmatprep.subr.mxu0 0.0
    %1375 = vmatpush1.msra.mxu0 %v1040
    %1376 = vmatprep.subr.mxu0 0.0
    %1377 = vmatpush1.msra.mxu0 %v1041
    %1378 = vmatprep.subr.mxu0 0.0
    %1379 = vmatpush1.msra.mxu0 %v1042
    %1380 = vmatprep.subr.mxu0 0.0
    %1381 = vmatpush1.msra.mxu0 %v1043
    %1382 = vmatprep.subr.mxu0 0.0
    %1383 = vmatpush1.msra.mxu0 %v1044
    %1384 = vmatprep.subr.mxu0 0.0
    %1385 = vmatpush1.msra.mxu0 %v1045
    %1386 = vmatprep.subr.mxu0 0.0
    %1387 = vmatpush1.msra.mxu0 %v1046
    %1388 = vmatprep.subr.mxu0 0.0
    %1389 = vmatpush1.msra.mxu0 %v1047
    %1390 = vmatprep.subr.mxu0 0.0
    %1391 = vmatpush1.msra.mxu0 %v1048
    %1392 = vmatprep.subr.mxu0 0.0
    %1393 = vmatpush1.msra.mxu0 %v1049
    %1394 = vmatprep.subr.mxu0 0.0
    %1395 = vmatpush1.msra.mxu0 %v1050
    %1396 = vmatprep.subr.mxu0 0.0
    %1397 = vmatpush1.msra.mxu0 %v1051
    %1398 = vmatprep.subr.mxu0 0.0
    %1399 = vmatpush1.msra.mxu0 %v1052
    %1400 = vmatprep.subr.mxu0 0.0
    %1401 = vmatpush1.msra.mxu0 %v1053
    %1402 = vmatprep.subr.mxu0 0.0
    %1403 = vmatpush1.msra.mxu0 %v1054
    %1404 = vmatprep.subr.mxu0 0.0
    %1405 = vmatpush1.msra.mxu0 %v1055
    %1406 = vmatprep.subr.mxu0 0.0
    %1407 = vmatpush1.msra.mxu0 %v1056
    %1408 = vmatprep.subr.mxu0 0.0
    %1409 = vmatpush1.msra.mxu0 %v1057
    %1410 = vmatprep.subr.mxu0 0.0
    %1411 = vmatpush1.msra.mxu0 %v1058
    %1412 = vmatprep.subr.mxu0 0.0
    %1413 = vmatpush1.msra.mxu0 %v1059
    %1414 = vmatprep.mubr.f32.mxu0 %v873
    %1415 = vmatmul.mubr.f32.gmra.mrb[0].mxu0 %v872
    %v1416 = vpop.f32.mrb[0].mxu0
    %v1417 = vadd.f32 %v1272, %v1416
    %v1418 = vpop.f32.mrb[0].mxu0
    %1419 = vmatprep.mubr.f32.mxu0 %v879
    %1420 = vmatmul.mubr.f32.gmra.mrb[0].mxu0 %v878
    %v1421 = vpop.f32.mrb[0].mxu0
    %v1422 = vadd.f32 %v1277, %v1421
    %v1423 = vpop.f32.mrb[0].mxu0
    %1424 = vmatprep.mubr.f32.mxu0 %v885
    %1425 = vmatmul.mubr.f32.gmra.mrb[0].mxu0 %v884
    %v1426 = vpop.f32.mrb[0].mxu0
    %v1427 = vadd.f32 %v1282, %v1426
    %v1428 = vpop.f32.mrb[0].mxu0
    %1429 = vmatprep.mubr.f32.mxu0 %v891
    %1430 = vmatmul.mubr.f32.gmra.mrb[0].mxu0 %v890
    %v1431 = vpop.f32.mrb[0].mxu0
    %v1432 = vadd.f32 %v1287, %v1431
    %v1433 = vpop.f32.mrb[0].mxu0
    %1434 = vmatprep.mubr.f32.mxu0 %v897
    %1435 = vmatmul.mubr.f32.gmra.mrb[0].mxu0 %v896
    %v1436 = vpop.f32.mrb[0].mxu0
    %v1437 = vadd.f32 %v1292, %v1436
    %v1438 = vpop.f32.mrb[0].mxu0
    %1439 = vmatprep.mubr.f32.mxu0 %v903
    %1440 = vmatmul.mubr.f32.gmra.mrb[0].mxu0 %v902
    %v1441 = vpop.f32.mrb[0].mxu0
    %v1442 = vadd.f32 %v1297, %v1441
    %v1443 = vpop.f32.mrb[0].mxu0
    %1444 = vmatprep.mubr.f32.mxu0 %v909
    %1445 = vmatmul.mubr.f32.gmra.mrb[0].mxu0 %v908
    %v1446 = vpop.f32.mrb[0].mxu0
    %v1447 = vadd.f32 %v1302, %v1446
    %v1448 = vpop.f32.mrb[0].mxu0
    %1449 = vmatprep.mubr.f32.mxu0 %v915
    %1450 = vmatmul.mubr.f32.gmra.mrb[0].mxu0 %v914
    %v1451 = vpop.f32.mrb[0].mxu0
    %v1452 = vadd.f32 %v1307, %v1451
    %v1453 = vpop.f32.mrb[0].mxu0
    %1454 = vmatprep.mubr.f32.mxu0 %v921
    %1455 = vmatmul.mubr.f32.gmra.mrb[0].mxu0 %v920
    %v1456 = vpop.f32.mrb[0].mxu0
    %v1457 = vadd.f32 %v1312, %v1456
    %v1458 = vpop.f32.mrb[0].mxu0
    %1459 = vmatprep.mubr.f32.mxu0 %v927
    %1460 = vmatmul.mubr.f32.gmra.mrb[0].mxu0 %v926
    %v1461 = vpop.f32.mrb[0].mxu0
    %v1462 = vadd.f32 %v1317, %v1461
    %v1463 = vpop.f32.mrb[0].mxu0
    %1464 = vmatprep.mubr.f32.mxu0 %v933
    %1465 = vmatmul.mubr.f32.gmra.mrb[0].mxu0 %v932
    %v1466 = vpop.f32.mrb[0].mxu0
    %v1467 = vadd.f32 %v1322, %v1466
    %v1468 = vpop.f32.mrb[0].mxu0
    %1469 = vmatprep.mubr.f32.mxu0 %v939
    %1470 = vmatmul.mubr.f32.gmra.mrb[0].mxu0 %v938
    %v1471 = vpop.f32.mrb[0].mxu0
    %v1472 = vadd.f32 %v1327, %v1471
    %v1473 = vpop.f32.mrb[0].mxu0
    %1474 = vmatprep.mubr.f32.mxu0 %v945
    %1475 = vmatmul.mubr.f32.gmra.mrb[0].mxu0 %v944
    %v1476 = vpop.f32.mrb[0].mxu0
    %v1477 = vadd.f32 %v1332, %v1476
    %v1478 = vpop.f32.mrb[0].mxu0
    %1479 = vmatprep.mubr.f32.mxu0 %v951
    %1480 = vmatmul.mubr.f32.gmra.mrb[0].mxu0 %v950
    %v1481 = vpop.f32.mrb[0].mxu0
    %v1482 = vadd.f32 %v1337, %v1481
    %v1483 = vpop.f32.mrb[0].mxu0
    %1484 = vmatprep.mubr.f32.mxu0 %v957
    %1485 = vmatmul.mubr.f32.gmra.mrb[0].mxu0 %v956
    %v1486 = vpop.f32.mrb[0].mxu0
    %v1487 = vadd.f32 %v1342, %v1486
    %v1488 = vpop.f32.mrb[0].mxu0
    %1489 = vmatprep.mubr.f32.mxu0 %v963
    %1490 = vmatmul.mubr.f32.gmra.mrb[0].mxu0 %v962
    %v1491 = vpop.f32.mrb[0].mxu0
    %v1492 = vadd.f32 %v1347, %v1491
    %v1493 = vpop.f32.mrb[0].mxu0
    %1494 = vdwg.mxu0
    %1495 = vst [vmem:[#allocation9] sm:$0xff] %v1417
    %1496 = vst [vmem:[#allocation9 + $0x8] sm:$0xff] %v1422
    %1497 = vst [vmem:[#allocation9 + $0x10] sm:$0xff] %v1427
    %1498 = vst [vmem:[#allocation9 + $0x18] sm:$0xff] %v1432
    %1499 = vst [vmem:[#allocation9 + $0x20] sm:$0xff] %v1437
    %1500 = vst [vmem:[#allocation9 + $0x28] sm:$0xff] %v1442
    %1501 = vst [vmem:[#allocation9 + $0x30] sm:$0xff] %v1447
    %1502 = vst [vmem:[#allocation9 + $0x38] sm:$0xff] %v1452
    %1503 = vst [vmem:[#allocation9 + $0x40] sm:$0xff] %v1457
    %1504 = vst [vmem:[#allocation9 + $0x48] sm:$0xff] %v1462
    %1505 = vst [vmem:[#allocation9 + $0x50] sm:$0xff] %v1467
    %1506 = vst [vmem:[#allocation9 + $0x58] sm:$0xff] %v1472
    %1507 = vst [vmem:[#allocation9 + $0x60] sm:$0xff] %v1477
    %1508 = vst [vmem:[#allocation9 + $0x68] sm:$0xff] %v1482
    %1509 = vst [vmem:[#allocation9 + $0x70] sm:$0xff] %v1487
    %1510 = vst [vmem:[#allocation9 + $0x78] sm:$0xff] %v1492
    %v1511 = vpack.c.bf16 %v113, %v112
    %v1513 = vunpack.c.l.b16 %v1511
    %v1514 = vunpack.c.h.b16 %v1511
    %v1515 = vpack.c.b16 %v1513, %v1513
    %v1516 = vpack.c.b16 %v1514, %v1514
    %1519 = vst [vmem:[#allocation11] sm:$0xf] %v1515
    %1520 = vst [vmem:[#allocation11 + $0x4] sm:$0xf] %v1516
    // Predicated region
    $region34: #{tpu_custom_call.1} parent=1 // pred_check
      _
    $region35: #{tpu_custom_call.1} parent=1 // pred_check_branch
      %1522 = sbr.rel (0) target = $region37
    $region36: #{tpu_custom_call.1} parent=1 // pred_region
      %s1524 = ssub.s32 512, 512
      %1525 = vsyncadd [#allocation4], %s1524
      %s1526 = sshll.u32 [#allocation8], 4
      %s1527 = int_to_ptr.vmem [resolvable:$true] %s1526
      %1532 = dma.vmem_to_hbm [thread:$0]  %s1527, 512, %s5, [#allocation4], 256, 256, 16
    $region37: #{tpu_custom_call.1} parent=1 // pred_fallthru
      _
    // Predicated region
    $region38: #{tpu_custom_call.1} parent=1 // pred_check
      _
    $region39: #{tpu_custom_call.1} parent=1 // pred_check_branch
      %1534 = sbr.rel (0) target = $region41
    $region40: #{tpu_custom_call.1} parent=1 // pred_region
      %s1536 = ssub.s32 2048, 2048
      %1537 = vsyncadd [#allocation10], %s1536
      %s1538 = sshll.u32 [#allocation9], 4
      %s1539 = int_to_ptr.vmem [resolvable:$true] %s1538
      %1544 = dma.vmem_to_hbm [thread:$0]  %s1539, 2048, %s6, [#allocation10], 128, 128, 8
    $region41: #{tpu_custom_call.1} parent=1 // pred_fallthru
      _
    // Predicated region
    $region42: #{tpu_custom_call.1} parent=1 // pred_check
      _
    $region43: #{tpu_custom_call.1} parent=1 // pred_check_branch
      %1546 = sbr.rel (0) target = $region45
    $region44: #{tpu_custom_call.1} parent=1 // pred_region
      %s1548 = ssub.s32 128, 128
      %1549 = vsyncadd [#allocation10], %s1548
      %s1550 = sshll.u32 [#allocation11], 4
      %s1551 = int_to_ptr.vmem [resolvable:$true] %s1550
      %1556 = dma.vmem_to_hbm [thread:$0]  %s1551, 128, %s7, [#allocation10], 64, 64, 4
    $region45: #{tpu_custom_call.1} parent=1 // pred_fallthru
      _
    // Predicated region
    $region46: #{tpu_custom_call.1} parent=1 // pred_check
      _
    $region47: #{tpu_custom_call.1} parent=1 // pred_check_branch
      %1558 = sbr.rel (0) target = $region49
    $region48: #{tpu_custom_call.1} parent=1 // pred_region
      %1559 = dma.done [#allocation4], 512
    $region49: #{tpu_custom_call.1} parent=1 // pred_fallthru
      _
    // Predicated region
    $region50: #{tpu_custom_call.1} parent=1 // pred_check
      _
    $region51: #{tpu_custom_call.1} parent=1 // pred_check_branch
      %1561 = sbr.rel (0) target = $region53
    $region52: #{tpu_custom_call.1} parent=1 // pred_region
      %1562 = dma.done [#allocation10], 2048
    $region53: #{tpu_custom_call.1} parent=1 // pred_fallthru
      _
    // Predicated region
    $region54: #{tpu_custom_call.1} parent=1 // pred_check
      _
    $region55: #{tpu_custom_call.1} parent=1 // pred_check_branch
      %1564 = sbr.rel (0) target = $region57
    $region56: #{tpu_custom_call.1} parent=1 // pred_region
      %1565 = dma.done [#allocation10], 128
    $region57: #{tpu_custom_call.1} parent=1 // pred_fallthru
      _
    %1566 = vsyncpa [#allocation3], 1
    %1567 = vsyncpa [#allocation6], 1
    %1568 = vsyncpa [#allocation4], 1
    %1569 = vsyncpa [#allocation10], 1

</llo_original>
